<compile_context>
chip_gen: v7x
topology: tpu7x:2x2x1
jax: 0.10.0
libtpu: 0.0.40
codegen_flags: <defaults>
</compile_context>

<pallas_src>
import jax
import jax.numpy as jnp
import numpy as np
from jax.experimental import pallas as pl
from jax.experimental.pallas import tpu as pltpu


def _round_up(x, m):
    return (x + m - 1) // m * m


def _tap_weights(w, w_in, cp, taps_per_group, group_lanes, lout_pad):
    """Fold a conv's (kh, kw, cin) taps into per-tap-group Toeplitz matmul weights.

    w: (Co, Ci, KH, KW) PyTorch OIHW.  The kernel's conv input for tap-group g is a
    row slab whose lane index is  half*(w_in*cp) + wi*cp + c  with half < taps_per_group
    referring to image row (r + half); group g covers kh = g*taps_per_group + half.
    The output lane index is  ow*Co + co  (< lout_pad, rest zero rows/cols).
    Returns an (n_groups, group_lanes, lout_pad) float32 array.
    """
    w = np.asarray(w, np.float32)
    co, ci, kh_sz, kw_sz = w.shape
    wout = w_in - kw_sz + 1
    n_groups = -(-kh_sz // taps_per_group)
    assert taps_per_group * w_in * cp <= group_lanes
    assert wout * co <= lout_pad
    t = np.zeros((n_groups, group_lanes, lout_pad), np.float32)
    for g in range(n_groups):
        for half in range(taps_per_group):
            kh = g * taps_per_group + half
            if kh >= kh_sz:
                continue
            base = half * w_in * cp
            for kw in range(kw_sz):
                for ow in range(wout):
                    r = base + (ow + kw) * cp
                    t[g, r:r + ci, ow * co:(ow + 1) * co] = w[:, :, kh, kw].T
    return t


def _make_kernel(cfg):
    bs_blk, agents = cfg["bs_blk"], cfg["agents"]
    n_g1, tpg1, glw1, rows1 = cfg["n_g1"], cfg["tpg1"], cfg["glw1"], cfg["rows1"]
    k2, lin2, rows2, lout2 = cfg["k2"], cfg["lin2"], cfg["rows2"], cfg["lout2"]
    hout2, wout2, c2 = cfg["hout2"], cfg["wout2"], cfg["c2"]
    nb = bs_blk * agents
    m1, m2 = nb * rows1, nb * rows2

    def kernel(x_ref, w1_ref, b1_ref, w2_ref, b2_ref, o_ref):
        # x_ref : (nb, hpad, glw1) bf16   rows of tpg1 kh-shifted image rows
        # w1_ref: (n_g1, glw1, lin2) bf16 per-group Toeplitz conv1 weight
        # w2_ref: (k2, lin2, lout2) bf16  per-tap Toeplitz conv2 weight
        # o_ref : (1, bs_blk, agents*c2)  pooled output, lane-dense 128-wide rows
        x = x_ref[...]

        # ---- conv1 + bias + ReLU: per-tap-group accumulating MXU matmuls (bf16->f32)
        acc1 = jnp.zeros((m1, lin2), jnp.float32)
        for g in range(n_g1):
            xs = x[:, g * tpg1:g * tpg1 + rows1, :].reshape(m1, glw1)
            acc1 = acc1 + jnp.dot(xs, w1_ref[g],
                                  preferred_element_type=jnp.float32)
        y1 = jnp.maximum(acc1 + b1_ref[...], 0.0)
        # rows 0..hout1-1 of each sample are valid; the rest are finite filler.
        y1 = y1.astype(jnp.bfloat16).reshape(nb, rows1, lin2)

        # ---- conv2 + bias + ReLU on the VMEM-resident y1 (never touches HBM) -----
        acc2 = jnp.zeros((m2, lout2), jnp.float32)
        for k in range(k2):
            ys = y1[:, k:k + rows2, :].reshape(m2, lin2)
            acc2 = acc2 + jnp.dot(ys, w2_ref[k],
                                  preferred_element_type=jnp.float32)
        z = jnp.maximum(acc2 + b2_ref[...], 0.0).reshape(nb, rows2, lout2)

        # ---- global max pool over the hout2 x wout2 valid positions ---------------
        zv = z[:, 0:hout2, :]                      # drop filler rows
        m = zv[:, :, 0:c2]
        for ow in range(1, wout2):
            m = jnp.maximum(m, zv[:, :, ow * c2:(ow + 1) * c2])
        pooled = jnp.max(m, axis=1)                # (nb, c2) f32

        # ---- lane-dense writeback: one 128-lane row per batch element -------------
        p3 = pooled.reshape(bs_blk, agents, c2)
        row = jnp.concatenate([p3[:, a, :] for a in range(agents)], axis=-1)
        o_ref[0] = row.astype(o_ref.dtype)

    return kernel


def make_encoder_forward(params, h, w, agents=4, max_bs_blk=8):
    """Precompute the structured weights once; return a jitted forward(states)."""
    (w1, b1), (w2, b2) = params                 # PyTorch layouts: (Co, Ci, K, K), (Co,)
    c1, cin, k1, _ = w1.shape
    c2, c1b, k2, _ = w2.shape
    assert c1b == c1 and cin <= 8

    hout1, wout1 = h - k1 + 1, w - k1 + 1
    hout2, wout2 = hout1 - k2 + 1, wout1 - k2 + 1
    assert hout2 >= 1 and wout2 >= 1

    # conv1 lane packing: cin padded only to cp1 (4), and tpg1 kh-taps packed per
    # 128-lane group so conv1's contraction carries minimal structural zeros.
    cp1 = 4 if cin <= 4 else 8
    wc1 = w * cp1
    tpg1 = max(1, min(k1, 128 // wc1))           # kh taps per 128-lane group
    glw1 = _round_up(tpg1 * wc1, 128)            # x lane width == per-group K
    n_g1 = -(-k1 // tpg1)                        # number of tap groups

    lin2 = _round_up(wout1 * c1, 128)            # conv1 output lane width (zero padded)
    lout2 = wout2 * c2                           # conv2 output lane width
    rows1 = _round_up(hout1, 8)                  # conv1 per-sample row block
    rows2 = _round_up(hout2, 8)                  # conv2 per-sample row block
    hpad = _round_up(rows1 + (n_g1 - 1) * tpg1, 8)
    # Invariants the correctness of the filler rows / zero lane padding hinges on:
    assert rows1 >= rows2 + k2 - 1
    assert (n_g1 - 1) * tpg1 + rows1 <= hpad

    # One-time host-side weight transforms (tiny; off the per-call hot path), bf16.
    w1cat = jnp.asarray(_tap_weights(w1, w, cp1, tpg1, glw1, lin2), jnp.bfloat16)
    w2cat = jnp.asarray(_tap_weights(w2, wout1, c1, 1, lin2, lout2), jnp.bfloat16)
    b1np = np.zeros((1, lin2), np.float32)
    b1np[0, :wout1 * c1] = np.tile(np.asarray(b1, np.float32), wout1)
    b1row = jnp.asarray(b1np)
    b2row = jnp.asarray(np.tile(np.asarray(b2, np.float32), wout2).reshape(1, lout2))

    def forward(states):
        bs, ag_ch, hh, ww = states.shape
        assert ag_ch == agents * cin and hh == h and ww == w
        n = bs * agents

        # Batch blocking: BS_BLK batch elements per grid step (amortizes per-step
        # overhead + weight reuse) while keeping the grid >= 2 steps for v7x's 2 TCs.
        bs_blk = 1
        for d in range(2, min(bs, max_bs_blk) + 1):
            if bs % d == 0 and bs // d >= 2:
                bs_blk = d
        nsteps = bs // bs_blk
        nb = bs_blk * agents

        # Cheap layout prep (one small XLA fusion): NCHW -> rows whose lane index is
        # half*(w*cp1) + w_idx*cp1 + c, half < tpg1 selecting image row r + half.
        # TODO(synk): for very large batches this extra HBM pass could be folded into
        # the producer or done in-kernel; at inference-size batches it is noise.
        x = states.reshape(n, cin, h, w)
        x = jnp.transpose(x, (0, 2, 3, 1))
        x = jnp.pad(x, ((0, 0), (0, hpad + tpg1 - 1 - h), (0, 0), (0, cp1 - cin)))
        x = x.reshape(n, hpad + tpg1 - 1, wc1)
        x = jnp.concatenate([x[:, s:s + hpad, :] for s in range(tpg1)], axis=-1)
        if glw1 > tpg1 * wc1:
            x = jnp.pad(x, ((0, 0), (0, 0), (0, glw1 - tpg1 * wc1)))
        x = x.astype(jnp.bfloat16)

        cfg = dict(bs_blk=bs_blk, agents=agents, n_g1=n_g1, tpg1=tpg1, glw1=glw1,
                   rows1=rows1, k2=k2, lin2=lin2, rows2=rows2, lout2=lout2,
                   hout2=hout2, wout2=wout2, c2=c2)
        kernel = _make_kernel(cfg)

        flops = 2 * n * (rows1 * glw1 * lin2 * n_g1 + rows2 * lin2 * lout2 * k2)
        bytes_accessed = int(2 * (x.size + w1cat.size + w2cat.size)
                             + 4 * (b1row.size + b2row.size + n * c2))

        out = pl.pallas_call(
            kernel,
            out_shape=jax.ShapeDtypeStruct((nsteps, bs_blk, agents * c2), jnp.float32),
            grid=(nsteps,),
            in_specs=[
                pl.BlockSpec((nb, hpad, glw1), lambda i: (i, 0, 0)),
                pl.BlockSpec(w1cat.shape, lambda i: (0, 0, 0)),
                pl.BlockSpec(b1row.shape, lambda i: (0, 0)),
                pl.BlockSpec(w2cat.shape, lambda i: (0, 0, 0)),
                pl.BlockSpec(b2row.shape, lambda i: (0, 0)),
            ],
            out_specs=pl.BlockSpec((1, bs_blk, agents * c2), lambda i: (i, 0, 0)),
            compiler_params=pltpu.CompilerParams(
                dimension_semantics=("parallel",)),
            cost_estimate=pl.CostEstimate(flops=flops, transcendentals=0,
                                          bytes_accessed=bytes_accessed),
        )(x, w1cat, b1row, w2cat, b2row)
        return out.reshape(bs, agents, c2)

    return jax.jit(forward)


def ref_forward(states, w1, b1, w2, b2):
    """Pure-JAX f32 reference mirroring the PyTorch forward (for validation)."""
    bs, ag_ch, h, w = states.shape
    x = states.reshape(bs * 4, ag_ch // 4, h, w)
    dn = ("NCHW", "OIHW", "NCHW")
    y = jax.lax.conv_general_dilated(x, w1, (1, 1), "VALID", dimension_numbers=dn)
    y = jax.nn.relu(y + b1[None, :, None, None])
    y = jax.lax.conv_general_dilated(y, w2, (1, 1), "VALID", dimension_numbers=dn)
    y = jax.nn.relu(y + b2[None, :, None, None])
    p = jnp.max(y, axis=(2, 3))
    return p.reshape(bs, 4, -1)


if __name__ == "__main__":
    key = jax.random.PRNGKey(0)
    k_in, k_w1, k_b1, k_w2, k_b2 = jax.random.split(key, 5)

    bs, h, w = 2, 16, 16
    agents, in_ch = 4, 3
    channels, filters = [16, 32], [8, 5]

    # deterministic synthetic parameters (PyTorch Conv2d shapes)
    w1 = 0.05 * jax.random.normal(k_w1, (channels[0], in_ch, filters[0], filters[0]), jnp.float32)
    b1 = 0.05 * jax.random.normal(k_b1, (channels[0],), jnp.float32)
    w2 = 0.05 * jax.random.normal(k_w2, (channels[1], channels[0], filters[1], filters[1]), jnp.float32)
    b2 = 0.05 * jax.random.normal(k_b2, (channels[1],), jnp.float32)

    states = jax.random.normal(k_in, (bs, agents * in_ch, h, w), jnp.float32)

    fwd = make_encoder_forward(((w1, b1), (w2, b2)), h, w, agents=agents)
    out = jax.block_until_ready(fwd(states))

    ref = ref_forward(states, w1, b1, w2, b2)
    assert out.shape == (bs, agents, channels[1]), out.shape
    # bf16 MXU path vs f32 reference -> loosened tolerance per perf review.
    assert jnp.allclose(out, ref, rtol=2e-2, atol=2e-2), float(jnp.max(jnp.abs(out - ref)))

    print("KERNEL_OK")
</pallas_src>

<mosaic_0001>
module attributes {stable_mosaic.version = 11 : i64} {
  func.func @kernel(%arg0: i32, %arg1: memref<4x24x128xbf16, #tpu.memory_space<vmem>>, %arg2: memref<4x128x256xbf16, #tpu.memory_space<vmem>>, %arg3: memref<1x256xf32, #tpu.memory_space<vmem>>, %arg4: memref<5x256x160xbf16, #tpu.memory_space<vmem>>, %arg5: memref<1x160xf32, #tpu.memory_space<vmem>>, %arg6: memref<1x1x128xf32, #tpu.memory_space<vmem>>) attributes {dimension_semantics = [#tpu.dimension_semantics<parallel>], iteration_bounds = array<i64: 2>, scalar_prefetch = 0 : i64, scratch_operands = 0 : i64, tpu.core_type = #tpu.core_type<tc>, window_params = [{transform_indices = @transform_0, window_bounds = array<i64: 4, 24, 128>}, {pipeline_mode = #tpu.pipeline_mode<synchronous>, transform_indices = @transform_1, window_bounds = array<i64: 4, 128, 256>}, {pipeline_mode = #tpu.pipeline_mode<synchronous>, transform_indices = @transform_2, window_bounds = array<i64: 1, 256>}, {pipeline_mode = #tpu.pipeline_mode<synchronous>, transform_indices = @transform_3, window_bounds = array<i64: 5, 256, 160>}, {pipeline_mode = #tpu.pipeline_mode<synchronous>, transform_indices = @transform_4, window_bounds = array<i64: 1, 160>}, {transform_indices = @transform_5, window_bounds = array<i64: 1, 1, 128>}]} {
    %c0 = arith.constant 0 : index
    %c0_0 = arith.constant 0 : index
    %c0_1 = arith.constant 0 : index
    %0 = vector.load %arg1[%c0, %c0_0, %c0_1] : memref<4x24x128xbf16, #tpu.memory_space<vmem>>, vector<4x24x128xbf16>
    %cst = arith.constant 0.000000e+00 : f32
    %1 = vector.broadcast %cst : f32 to vector<64x256xf32>
    %2 = vector.extract_strided_slice %0 {offsets = [0, 0, 0], sizes = [4, 16, 128], strides = [1, 1, 1]} : vector<4x24x128xbf16> to vector<4x16x128xbf16>
    %3 = vector.shape_cast %2 : vector<4x16x128xbf16> to vector<64x128xbf16>
    %c0_2 = arith.constant 0 : index
    %c0_3 = arith.constant 0 : index
    %c0_4 = arith.constant 0 : index
    %4 = vector.load %arg2[%c0_2, %c0_3, %c0_4] : memref<4x128x256xbf16, #tpu.memory_space<vmem>>, vector<1x128x256xbf16>
    %5 = vector.shape_cast %4 : vector<1x128x256xbf16> to vector<128x256xbf16>
    %cst_5 = arith.constant dense<0.000000e+00> : vector<64x256xf32>
    %6 = tpu.matmul %3, %5, %cst_5 {dimension_numbers = #tpu.dot_dimension_numbers<[1], [0], [0], [1], [0, 0, 1, 1], [], []>} : vector<64x128xbf16>, vector<128x256xbf16>, vector<64x256xf32> -> vector<64x256xf32>
    %7 = arith.addf %1, %6 : vector<64x256xf32>
    %8 = vector.extract_strided_slice %0 {offsets = [0, 2, 0], sizes = [4, 16, 128], strides = [1, 1, 1]} : vector<4x24x128xbf16> to vector<4x16x128xbf16>
    %9 = vector.shape_cast %8 : vector<4x16x128xbf16> to vector<64x128xbf16>
    %c1 = arith.constant 1 : index
    %c0_6 = arith.constant 0 : index
    %c0_7 = arith.constant 0 : index
    %10 = vector.load %arg2[%c1, %c0_6, %c0_7] : memref<4x128x256xbf16, #tpu.memory_space<vmem>>, vector<1x128x256xbf16>
    %11 = vector.shape_cast %10 : vector<1x128x256xbf16> to vector<128x256xbf16>
    %cst_8 = arith.constant dense<0.000000e+00> : vector<64x256xf32>
    %12 = tpu.matmul %9, %11, %cst_8 {dimension_numbers = #tpu.dot_dimension_numbers<[1], [0], [0], [1], [0, 0, 1, 1], [], []>} : vector<64x128xbf16>, vector<128x256xbf16>, vector<64x256xf32> -> vector<64x256xf32>
    %13 = arith.addf %7, %12 : vector<64x256xf32>
    %14 = vector.extract_strided_slice %0 {offsets = [0, 4, 0], sizes = [4, 16, 128], strides = [1, 1, 1]} : vector<4x24x128xbf16> to vector<4x16x128xbf16>
    %15 = vector.shape_cast %14 : vector<4x16x128xbf16> to vector<64x128xbf16>
    %c2 = arith.constant 2 : index
    %c0_9 = arith.constant 0 : index
    %c0_10 = arith.constant 0 : index
    %16 = vector.load %arg2[%c2, %c0_9, %c0_10] : memref<4x128x256xbf16, #tpu.memory_space<vmem>>, vector<1x128x256xbf16>
    %17 = vector.shape_cast %16 : vector<1x128x256xbf16> to vector<128x256xbf16>
    %cst_11 = arith.constant dense<0.000000e+00> : vector<64x256xf32>
    %18 = tpu.matmul %15, %17, %cst_11 {dimension_numbers = #tpu.dot_dimension_numbers<[1], [0], [0], [1], [0, 0, 1, 1], [], []>} : vector<64x128xbf16>, vector<128x256xbf16>, vector<64x256xf32> -> vector<64x256xf32>
    %19 = arith.addf %13, %18 : vector<64x256xf32>
    %20 = vector.extract_strided_slice %0 {offsets = [0, 6, 0], sizes = [4, 16, 128], strides = [1, 1, 1]} : vector<4x24x128xbf16> to vector<4x16x128xbf16>
    %21 = vector.shape_cast %20 : vector<4x16x128xbf16> to vector<64x128xbf16>
    %c3 = arith.constant 3 : index
    %c0_12 = arith.constant 0 : index
    %c0_13 = arith.constant 0 : index
    %22 = vector.load %arg2[%c3, %c0_12, %c0_13] : memref<4x128x256xbf16, #tpu.memory_space<vmem>>, vector<1x128x256xbf16>
    %23 = vector.shape_cast %22 : vector<1x128x256xbf16> to vector<128x256xbf16>
    %cst_14 = arith.constant dense<0.000000e+00> : vector<64x256xf32>
    %24 = tpu.matmul %21, %23, %cst_14 {dimension_numbers = #tpu.dot_dimension_numbers<[1], [0], [0], [1], [0, 0, 1, 1], [], []>} : vector<64x128xbf16>, vector<128x256xbf16>, vector<64x256xf32> -> vector<64x256xf32>
    %25 = arith.addf %19, %24 : vector<64x256xf32>
    %c0_15 = arith.constant 0 : index
    %c0_16 = arith.constant 0 : index
    %26 = vector.load %arg3[%c0_15, %c0_16] : memref<1x256xf32, #tpu.memory_space<vmem>>, vector<1x256xf32>
    %27 = vector.broadcast %26 : vector<1x256xf32> to vector<64x256xf32>
    %28 = arith.addf %25, %27 : vector<64x256xf32>
    %cst_17 = arith.constant 0.000000e+00 : f32
    %29 = vector.broadcast %cst_17 : f32 to vector<64x256xf32>
    %30 = arith.maximumf %28, %29 : vector<64x256xf32>
    %31 = arith.truncf %30 : vector<64x256xf32> to vector<64x256xbf16>
    %32 = vector.shape_cast %31 : vector<64x256xbf16> to vector<4x16x256xbf16>
    %cst_18 = arith.constant 0.000000e+00 : f32
    %33 = vector.broadcast %cst_18 : f32 to vector<32x160xf32>
    %34 = vector.extract_strided_slice %32 {offsets = [0, 0, 0], sizes = [4, 8, 256], strides = [1, 1, 1]} : vector<4x16x256xbf16> to vector<4x8x256xbf16>
    %35 = vector.shape_cast %34 : vector<4x8x256xbf16> to vector<32x256xbf16>
    %c0_19 = arith.constant 0 : index
    %c0_20 = arith.constant 0 : index
    %c0_21 = arith.constant 0 : index
    %36 = vector.load %arg4[%c0_19, %c0_20, %c0_21] : memref<5x256x160xbf16, #tpu.memory_space<vmem>>, vector<1x256x160xbf16>
    %37 = vector.shape_cast %36 : vector<1x256x160xbf16> to vector<256x160xbf16>
    %cst_22 = arith.constant dense<0.000000e+00> : vector<32x160xf32>
    %38 = tpu.matmul %35, %37, %cst_22 {dimension_numbers = #tpu.dot_dimension_numbers<[1], [0], [0], [1], [0, 0, 1, 1], [], []>} : vector<32x256xbf16>, vector<256x160xbf16>, vector<32x160xf32> -> vector<32x160xf32>
    %39 = arith.addf %33, %38 : vector<32x160xf32>
    %40 = vector.extract_strided_slice %32 {offsets = [0, 1, 0], sizes = [4, 8, 256], strides = [1, 1, 1]} : vector<4x16x256xbf16> to vector<4x8x256xbf16>
    %41 = vector.shape_cast %40 : vector<4x8x256xbf16> to vector<32x256xbf16>
    %c1_23 = arith.constant 1 : index
    %c0_24 = arith.constant 0 : index
    %c0_25 = arith.constant 0 : index
    %42 = vector.load %arg4[%c1_23, %c0_24, %c0_25] : memref<5x256x160xbf16, #tpu.memory_space<vmem>>, vector<1x256x160xbf16>
    %43 = vector.shape_cast %42 : vector<1x256x160xbf16> to vector<256x160xbf16>
    %cst_26 = arith.constant dense<0.000000e+00> : vector<32x160xf32>
    %44 = tpu.matmul %41, %43, %cst_26 {dimension_numbers = #tpu.dot_dimension_numbers<[1], [0], [0], [1], [0, 0, 1, 1], [], []>} : vector<32x256xbf16>, vector<256x160xbf16>, vector<32x160xf32> -> vector<32x160xf32>
    %45 = arith.addf %39, %44 : vector<32x160xf32>
    %46 = vector.extract_strided_slice %32 {offsets = [0, 2, 0], sizes = [4, 8, 256], strides = [1, 1, 1]} : vector<4x16x256xbf16> to vector<4x8x256xbf16>
    %47 = vector.shape_cast %46 : vector<4x8x256xbf16> to vector<32x256xbf16>
    %c2_27 = arith.constant 2 : index
    %c0_28 = arith.constant 0 : index
    %c0_29 = arith.constant 0 : index
    %48 = vector.load %arg4[%c2_27, %c0_28, %c0_29] : memref<5x256x160xbf16, #tpu.memory_space<vmem>>, vector<1x256x160xbf16>
    %49 = vector.shape_cast %48 : vector<1x256x160xbf16> to vector<256x160xbf16>
    %cst_30 = arith.constant dense<0.000000e+00> : vector<32x160xf32>
    %50 = tpu.matmul %47, %49, %cst_30 {dimension_numbers = #tpu.dot_dimension_numbers<[1], [0], [0], [1], [0, 0, 1, 1], [], []>} : vector<32x256xbf16>, vector<256x160xbf16>, vector<32x160xf32> -> vector<32x160xf32>
    %51 = arith.addf %45, %50 : vector<32x160xf32>
    %52 = vector.extract_strided_slice %32 {offsets = [0, 3, 0], sizes = [4, 8, 256], strides = [1, 1, 1]} : vector<4x16x256xbf16> to vector<4x8x256xbf16>
    %53 = vector.shape_cast %52 : vector<4x8x256xbf16> to vector<32x256xbf16>
    %c3_31 = arith.constant 3 : index
    %c0_32 = arith.constant 0 : index
    %c0_33 = arith.constant 0 : index
    %54 = vector.load %arg4[%c3_31, %c0_32, %c0_33] : memref<5x256x160xbf16, #tpu.memory_space<vmem>>, vector<1x256x160xbf16>
    %55 = vector.shape_cast %54 : vector<1x256x160xbf16> to vector<256x160xbf16>
    %cst_34 = arith.constant dense<0.000000e+00> : vector<32x160xf32>
    %56 = tpu.matmul %53, %55, %cst_34 {dimension_numbers = #tpu.dot_dimension_numbers<[1], [0], [0], [1], [0, 0, 1, 1], [], []>} : vector<32x256xbf16>, vector<256x160xbf16>, vector<32x160xf32> -> vector<32x160xf32>
    %57 = arith.addf %51, %56 : vector<32x160xf32>
    %58 = vector.extract_strided_slice %32 {offsets = [0, 4, 0], sizes = [4, 8, 256], strides = [1, 1, 1]} : vector<4x16x256xbf16> to vector<4x8x256xbf16>
    %59 = vector.shape_cast %58 : vector<4x8x256xbf16> to vector<32x256xbf16>
    %c4 = arith.constant 4 : index
    %c0_35 = arith.constant 0 : index
    %c0_36 = arith.constant 0 : index
    %60 = vector.load %arg4[%c4, %c0_35, %c0_36] : memref<5x256x160xbf16, #tpu.memory_space<vmem>>, vector<1x256x160xbf16>
    %61 = vector.shape_cast %60 : vector<1x256x160xbf16> to vector<256x160xbf16>
    %cst_37 = arith.constant dense<0.000000e+00> : vector<32x160xf32>
    %62 = tpu.matmul %59, %61, %cst_37 {dimension_numbers = #tpu.dot_dimension_numbers<[1], [0], [0], [1], [0, 0, 1, 1], [], []>} : vector<32x256xbf16>, vector<256x160xbf16>, vector<32x160xf32> -> vector<32x160xf32>
    %63 = arith.addf %57, %62 : vector<32x160xf32>
    %c0_38 = arith.constant 0 : index
    %c0_39 = arith.constant 0 : index
    %64 = vector.load %arg5[%c0_38, %c0_39] : memref<1x160xf32, #tpu.memory_space<vmem>>, vector<1x160xf32>
    %65 = vector.broadcast %64 : vector<1x160xf32> to vector<32x160xf32>
    %66 = arith.addf %63, %65 : vector<32x160xf32>
    %cst_40 = arith.constant 0.000000e+00 : f32
    %67 = vector.broadcast %cst_40 : f32 to vector<32x160xf32>
    %68 = arith.maximumf %66, %67 : vector<32x160xf32>
    %69 = vector.shape_cast %68 : vector<32x160xf32> to vector<4x8x160xf32>
    %70 = vector.extract_strided_slice %69 {offsets = [0, 0, 0], sizes = [4, 5, 160], strides = [1, 1, 1]} : vector<4x8x160xf32> to vector<4x5x160xf32>
    %71 = vector.extract_strided_slice %70 {offsets = [0, 0, 0], sizes = [4, 5, 32], strides = [1, 1, 1]} : vector<4x5x160xf32> to vector<4x5x32xf32>
    %72 = vector.extract_strided_slice %70 {offsets = [0, 0, 32], sizes = [4, 5, 32], strides = [1, 1, 1]} : vector<4x5x160xf32> to vector<4x5x32xf32>
    %73 = arith.maximumf %71, %72 : vector<4x5x32xf32>
    %74 = vector.extract_strided_slice %70 {offsets = [0, 0, 64], sizes = [4, 5, 32], strides = [1, 1, 1]} : vector<4x5x160xf32> to vector<4x5x32xf32>
    %75 = arith.maximumf %73, %74 : vector<4x5x32xf32>
    %76 = vector.extract_strided_slice %70 {offsets = [0, 0, 96], sizes = [4, 5, 32], strides = [1, 1, 1]} : vector<4x5x160xf32> to vector<4x5x32xf32>
    %77 = arith.maximumf %75, %76 : vector<4x5x32xf32>
    %78 = vector.extract_strided_slice %70 {offsets = [0, 0, 128], sizes = [4, 5, 32], strides = [1, 1, 1]} : vector<4x5x160xf32> to vector<4x5x32xf32>
    %79 = arith.maximumf %77, %78 : vector<4x5x32xf32>
    %cst_41 = arith.constant dense<0xFF800000> : vector<4x32xf32>
    %80 = vector.multi_reduction <maximumf>, %79, %cst_41 [1] : vector<4x5x32xf32> to vector<4x32xf32>
    %81 = vector.shape_cast %80 : vector<4x32xf32> to vector<1x4x32xf32>
    %82 = vector.extract_strided_slice %81 {offsets = [0, 0, 0], sizes = [1, 1, 32], strides = [1, 1, 1]} : vector<1x4x32xf32> to vector<1x1x32xf32>
    %83 = vector.shape_cast %82 : vector<1x1x32xf32> to vector<1x32xf32>
    %84 = vector.extract_strided_slice %81 {offsets = [0, 1, 0], sizes = [1, 1, 32], strides = [1, 1, 1]} : vector<1x4x32xf32> to vector<1x1x32xf32>
    %85 = vector.shape_cast %84 : vector<1x1x32xf32> to vector<1x32xf32>
    %86 = vector.extract_strided_slice %81 {offsets = [0, 2, 0], sizes = [1, 1, 32], strides = [1, 1, 1]} : vector<1x4x32xf32> to vector<1x1x32xf32>
    %87 = vector.shape_cast %86 : vector<1x1x32xf32> to vector<1x32xf32>
    %88 = vector.extract_strided_slice %81 {offsets = [0, 3, 0], sizes = [1, 1, 32], strides = [1, 1, 1]} : vector<1x4x32xf32> to vector<1x1x32xf32>
    %89 = vector.shape_cast %88 : vector<1x1x32xf32> to vector<1x32xf32>
    %90 = tpu.concatenate %83, %85, %87, %89 in 1 : vector<1x32xf32>, vector<1x32xf32>, vector<1x32xf32>, vector<1x32xf32> -> vector<1x128xf32>
    %c0_42 = arith.constant 0 : index
    %c0_43 = arith.constant 0 : index
    %c0_44 = arith.constant 0 : index
    %91 = vector.load %arg6[%c0_42, %c0_43, %c0_44] : memref<1x1x128xf32, #tpu.memory_space<vmem>>, vector<1x1x128xf32>
    %92 = vector.shape_cast %91 : vector<1x1x128xf32> to vector<1x128xf32>
    %93 = vector.shape_cast %90 : vector<1x128xf32> to vector<1x1x128xf32>
    tpu.vector_store %arg6[%c0_42, %c0_43, %c0_44], %93 {strides = array<i32>} : memref<1x1x128xf32, #tpu.memory_space<vmem>>, vector<1x1x128xf32>,
    return
  }
  func.func @transform_0(%arg0: i32) -> (i32, i32, i32) {
    %c0_i32 = arith.constant 0 : i32
    %c0_i32_0 = arith.constant 0 : i32
    %c0_i32_1 = arith.constant 0 : i32
    return %arg0, %c0_i32, %c0_i32_0 : i32, i32, i32
  }
  func.func @transform_1(%arg0: i32) -> (i32, i32, i32) {
    %c0_i32 = arith.constant 0 : i32
    %c0_i32_0 = arith.constant 0 : i32
    %c0_i32_1 = arith.constant 0 : i32
    %c0_i32_2 = arith.constant 0 : i32
    return %c0_i32, %c0_i32_0, %c0_i32_1 : i32, i32, i32
  }
  func.func @transform_2(%arg0: i32) -> (i32, i32) {
    %c0_i32 = arith.constant 0 : i32
    %c0_i32_0 = arith.constant 0 : i32
    %c0_i32_1 = arith.constant 0 : i32
    return %c0_i32, %c0_i32_0 : i32, i32
  }
  func.func @transform_3(%arg0: i32) -> (i32, i32, i32) {
    %c0_i32 = arith.constant 0 : i32
    %c0_i32_0 = arith.constant 0 : i32
    %c0_i32_1 = arith.constant 0 : i32
    %c0_i32_2 = arith.constant 0 : i32
    return %c0_i32, %c0_i32_0, %c0_i32_1 : i32, i32, i32
  }
  func.func @transform_4(%arg0: i32) -> (i32, i32) {
    %c0_i32 = arith.constant 0 : i32
    %c0_i32_0 = arith.constant 0 : i32
    %c0_i32_1 = arith.constant 0 : i32
    return %c0_i32, %c0_i32_0 : i32, i32
  }
  func.func @transform_5(%arg0: i32) -> (i32, i32, i32) {
    %c0_i32 = arith.constant 0 : i32
    %c0_i32_0 = arith.constant 0 : i32
    %c0_i32_1 = arith.constant 0 : i32
    return %arg0, %c0_i32, %c0_i32_0 : i32, i32, i32
  }
}

</mosaic_0001>

<llo_original>
// kernel: forward.1
$region0: #{forward.1}
  #allocation0 [shape = 'u32[]', space=smem, size = 0x4, offset = 0x4, fixed_abs, tag = 'smem constant byte address 0x4 - core index']
  #allocation1 [shape = 'u32[144,128]{1,0:T(1,128)}', space=vmem, size = 0x12000, scoped, tag = 'internal scratch']
  %s0 = inlined_call_operand.vmem [shape: bf16[8,24,128], index: 0, kind: input, shape index: {}]
  %s1 = inlined_call_operand.vmem [shape: bf16[4,128,256], index: 1, kind: input, shape index: {}]
  %s2 = inlined_call_operand.vmem [shape: f32[1,256], index: 2, kind: input, shape index: {}]
  %s3 = inlined_call_operand.vmem [shape: bf16[5,256,160], index: 3, kind: input, shape index: {}]
  %s4 = inlined_call_operand.vmem [shape: f32[1,160], index: 4, kind: input, shape index: {}]
  %s5 = inlined_call_operand.vmem [shape: f32[2,1,128], index: 5, kind: output, shape index: {}]
  %s6 = sld [smem:[#allocation0]]
  $region53: #{forward.1} parent=0
    _
  %s8 = ssub.s32 1, %s6
  %s9 = scalar_select 0, %s8, %s6
  loop: start=0, step=1, limit=4
  $region2: #{forward.1} parent=0 // loop_pre_header
    _
  $region3: #{forward.1} parent=0 // loop_header
    %s11 = sphi 0, %s15
    %p12 = scmp.ge.s32.totalorder %s11, 4
    %s21 = sphi 0, %s23
    %s24 = sphi 0, %s21
    %s25 = sphi 0, %s24
    %s41 = sphi 0, %s25
    %s45 = sphi 0, %s45
    %s47 = sphi 0, %s45
    %s48 = sphi 0, %s47
    %s62 = sphi 0, %s48
    %s66 = sphi 0, %s66
    %s68 = sphi 0, %s66
    %s69 = sphi 0, %s68
    %s83 = sphi 0, %s69
    %s87 = sphi 0, %s87
    %s89 = sphi 0, %s87
    %s90 = sphi 0, %s89
    %s104 = sphi 0, %s90
    %s108 = sphi 0, %s108
    %s110 = sphi 0, %s108
    %s111 = sphi 0, %s110
    %s125 = sphi 0, %s111
    %s131 = sphi 0, %s133
    %s134 = sphi 0, %s131
    %s135 = sphi 0, %s134
    %s151 = sphi 0, %s135
  $region4: #{forward.1} parent=0 // loop_header_branch
    %14 = sbr.rel (%p12) target = $region8
  $region5: #{forward.1} parent=0 // loop_body
    %s16 = ssub.s32 %s11, 1
    %s17 = ssub.s32 %s11, 2
    %s18 = sadd.s32 %s11, 1
    %s19 = ssub.s32 %s11, %s18
    %p20 = scmp.eq.s32.totalorder %s19, 0
    %s22 = sadd.s32 %s21, 1
    %s23 = scalar_select %p20, %s21, %s22
    %p26 = pneg %p20
    %p27 = scmp.eq.s32.totalorder %s11, 1
    %p28 = por %p26, %p27
    %p29 = scmp.ne.s32.totalorder %s21, %s24
    %p30 = scmp.eq.s32.totalorder %s11, 0
    %p31 = por %p29, %p30
    %p32 = scmp.ne.s32.totalorder %s21, %s24
    %p33 = scmp.eq.s32.totalorder %s16, 1
    %p34 = por %p32, %p33
    %p35 = scmp.ne.s32.totalorder %s24, %s25
    %p36 = scmp.eq.s32.totalorder %s16, 0
    %p37 = por %p35, %p36
    %p38 = scmp.ne.s32.totalorder %s24, %s25
    %p39 = scmp.eq.s32.totalorder %s17, 1
    %p40 = por %p38, %p39
    %p42 = scmp.ne.s32.totalorder %s25, %s41
    %p43 = scmp.eq.s32.totalorder %s17, 0
    %p44 = por %p42, %p43
    %s46 = sadd.s32 %s45, 1
    %p49 = scmp.eq.s32.totalorder %s11, 1
    %p50 = scmp.ne.s32.totalorder %s45, %s47
    %p51 = scmp.eq.s32.totalorder %s11, 0
    %p52 = por %p50, %p51
    %p53 = scmp.ne.s32.totalorder %s45, %s47
    %p54 = scmp.eq.s32.totalorder %s16, 1
    %p55 = por %p53, %p54
    %p56 = scmp.ne.s32.totalorder %s47, %s48
    %p57 = scmp.eq.s32.totalorder %s16, 0
    %p58 = por %p56, %p57
    %p59 = scmp.ne.s32.totalorder %s47, %s48
    %p60 = scmp.eq.s32.totalorder %s17, 1
    %p61 = por %p59, %p60
    %p63 = scmp.ne.s32.totalorder %s48, %s62
    %p64 = scmp.eq.s32.totalorder %s17, 0
    %p65 = por %p63, %p64
    %s67 = sadd.s32 %s66, 1
    %p70 = scmp.eq.s32.totalorder %s11, 1
    %p71 = scmp.ne.s32.totalorder %s66, %s68
    %p72 = scmp.eq.s32.totalorder %s11, 0
    %p73 = por %p71, %p72
    %p74 = scmp.ne.s32.totalorder %s66, %s68
    %p75 = scmp.eq.s32.totalorder %s16, 1
    %p76 = por %p74, %p75
    %p77 = scmp.ne.s32.totalorder %s68, %s69
    %p78 = scmp.eq.s32.totalorder %s16, 0
    %p79 = por %p77, %p78
    %p80 = scmp.ne.s32.totalorder %s68, %s69
    %p81 = scmp.eq.s32.totalorder %s17, 1
    %p82 = por %p80, %p81
    %p84 = scmp.ne.s32.totalorder %s69, %s83
    %p85 = scmp.eq.s32.totalorder %s17, 0
    %p86 = por %p84, %p85
    %s88 = sadd.s32 %s87, 1
    %p91 = scmp.eq.s32.totalorder %s11, 1
    %p92 = scmp.ne.s32.totalorder %s87, %s89
    %p93 = scmp.eq.s32.totalorder %s11, 0
    %p94 = por %p92, %p93
    %p95 = scmp.ne.s32.totalorder %s87, %s89
    %p96 = scmp.eq.s32.totalorder %s16, 1
    %p97 = por %p95, %p96
    %p98 = scmp.ne.s32.totalorder %s89, %s90
    %p99 = scmp.eq.s32.totalorder %s16, 0
    %p100 = por %p98, %p99
    %p101 = scmp.ne.s32.totalorder %s89, %s90
    %p102 = scmp.eq.s32.totalorder %s17, 1
    %p103 = por %p101, %p102
    %p105 = scmp.ne.s32.totalorder %s90, %s104
    %p106 = scmp.eq.s32.totalorder %s17, 0
    %p107 = por %p105, %p106
    %s109 = sadd.s32 %s108, 1
    %p112 = scmp.eq.s32.totalorder %s11, 1
    %p113 = scmp.ne.s32.totalorder %s108, %s110
    %p114 = scmp.eq.s32.totalorder %s11, 0
    %p115 = por %p113, %p114
    %p116 = scmp.ne.s32.totalorder %s108, %s110
    %p117 = scmp.eq.s32.totalorder %s16, 1
    %p118 = por %p116, %p117
    %p119 = scmp.ne.s32.totalorder %s110, %s111
    %p120 = scmp.eq.s32.totalorder %s16, 0
    %p121 = por %p119, %p120
    %p122 = scmp.ne.s32.totalorder %s110, %s111
    %p123 = scmp.eq.s32.totalorder %s17, 1
    %p124 = por %p122, %p123
    %p126 = scmp.ne.s32.totalorder %s111, %s125
    %p127 = scmp.eq.s32.totalorder %s17, 0
    %p128 = por %p126, %p127
    %s129 = ssub.s32 %s11, %s18
    %p130 = scmp.eq.s32.totalorder %s129, 0
    %s132 = sadd.s32 %s131, 1
    %s133 = scalar_select %p130, %s131, %s132
    %p136 = pneg %p130
    %p137 = scmp.eq.s32.totalorder %s11, 1
    %p138 = por %p136, %p137
    %p139 = scmp.ne.s32.totalorder %s131, %s134
    %p140 = scmp.eq.s32.totalorder %s11, 0
    %p141 = por %p139, %p140
    %p142 = scmp.ne.s32.totalorder %s131, %s134
    %p143 = scmp.eq.s32.totalorder %s16, 1
    %p144 = por %p142, %p143
    %p145 = scmp.ne.s32.totalorder %s134, %s135
    %p146 = scmp.eq.s32.totalorder %s16, 0
    %p147 = por %p145, %p146
    %p148 = scmp.ne.s32.totalorder %s134, %s135
    %p149 = scmp.eq.s32.totalorder %s17, 1
    %p150 = por %p148, %p149
    %p152 = scmp.ne.s32.totalorder %s135, %s151
    %p153 = scmp.eq.s32.totalorder %s17, 0
    %p154 = por %p152, %p153
    %p155 = scmp.le.s32.totalorder 1, %s11
    %p156 = scmp.lt.s32.totalorder %s11, 3
    %p157 = pnand %p155, %p156
    %p158 = pneg %p157
    // Predicated region
    $region9: #{forward.1} parent=5 // pred_check
      _
    $region10: #{forward.1} parent=5 // pred_check_branch
      %160 = sbr.rel (%p157) target = $region12
    $region11: #{forward.1} parent=5 // pred_region
      %s161 = ssub.s32 %s11, 1
      // Predicated region
      $region13: #{forward.1} parent=11 // pred_check
        %p162 = pneg %p58
      $region14: #{forward.1} parent=11 // pred_check_branch
        %164 = sbr.rel (%p162) target = $region16
      $region15: #{forward.1} parent=11 // pred_region
        _
      $region16: #{forward.1} parent=11 // pred_fallthru
        _
      // Predicated region
      $region17: #{forward.1} parent=11 // pred_check
        %p165 = pneg %p79
      $region18: #{forward.1} parent=11 // pred_check_branch
        %167 = sbr.rel (%p165) target = $region20
      $region19: #{forward.1} parent=11 // pred_region
        _
      $region20: #{forward.1} parent=11 // pred_fallthru
        _
      // Predicated region
      $region21: #{forward.1} parent=11 // pred_check
        %p168 = pneg %p100
      $region22: #{forward.1} parent=11 // pred_check_branch
        %170 = sbr.rel (%p168) target = $region24
      $region23: #{forward.1} parent=11 // pred_region
        _
      $region24: #{forward.1} parent=11 // pred_fallthru
        _
      // Predicated region
      $region25: #{forward.1} parent=11 // pred_check
        %p171 = pneg %p121
      $region26: #{forward.1} parent=11 // pred_check_branch
        %173 = sbr.rel (%p171) target = $region28
      $region27: #{forward.1} parent=11 // pred_region
        _
      $region28: #{forward.1} parent=11 // pred_fallthru
        _
    $region12: #{forward.1} parent=5 // pred_fallthru
      _
    %p174 = scmp.lt.s32.totalorder %s11, 2
    // Predicated region
    $region29: #{forward.1} parent=5 // pred_check
      %p175 = pneg %p174
    $region30: #{forward.1} parent=5 // pred_check_branch
      %177 = sbr.rel (%p175) target = $region32
    $region31: #{forward.1} parent=5 // pred_region
      // Predicated region
      $region33: #{forward.1} parent=31 // pred_check
        %p178 = pneg %p31
      $region34: #{forward.1} parent=31 // pred_check_branch
        %180 = sbr.rel (%p178) target = $region36
      $region35: #{forward.1} parent=31 // pred_region
        %s181 = smul.u32 4, %s11
        %p182 = scmp.lt.s32.totalorder %s181, 7
        %s183 = scalar_select %p182, %s181, 7
        %s184 = smul.addr %s183, 3
        %s185 = smul.addr %s184, 4
        %s186 = scalar_lea.vmem %s0, %s185
        %s187 = smul.u32 4, %s11
      $region36: #{forward.1} parent=31 // pred_fallthru
        _
    $region32: #{forward.1} parent=5 // pred_fallthru
      _
    %p188 = scmp.le.s32.totalorder 1, %s11
    %p189 = scmp.lt.s32.totalorder %s11, 3
    %p190 = pnand %p188, %p189
    %p191 = pneg %p190
    // Predicated region
    $region37: #{forward.1} parent=5 // pred_check
      _
    $region38: #{forward.1} parent=5 // pred_check_branch
      %193 = sbr.rel (%p190) target = $region40
    $region39: #{forward.1} parent=5 // pred_region
      %s194 = ssub.s32 %s11, 1
      %s195 = smul.u32 4, %s16
      %p196 = scmp.lt.s32.totalorder %s195, 7
      %s197 = scalar_select %p196, %s195, 7
      %s198 = smul.addr %s197, 3
      %s199 = smul.addr %s198, 4
      %s200 = scalar_lea.vmem %s0, %s199
      %p201 = pneg %p37
      %p202 = pneg %p34
      %p203 = pneg %p58
      %p204 = pneg %p55
      %p205 = pneg %p79
      %p206 = pneg %p76
      %p207 = pneg %p100
      %p208 = pneg %p97
      %p209 = pneg %p121
      %p210 = pneg %p118
      %p211 = pneg %p147
      %p212 = pneg %p144
      %p213 = scmp.lt.s32.totalorder %s16, 1
      %s214 = scalar_select %p213, %s16, 1
      %s215 = scalar_lea.vmem %s5, %s214
      %s216 = smul.u32 4, %s16
      %p217 = scmp.lt.s32.totalorder %s216, 7
      %s218 = scalar_select %p217, %s216, 7
      %s219 = smul.addr %s218, 3
      %s220 = smul.addr %s219, 4
      %s221 = scalar_lea.vmem %s0, %s220
      %s222 = smul.u32 4, %s16
      %p223 = scmp.lt.s32.totalorder %s16, 1
      %s224 = scalar_select %p223, %s16, 1
      %s225 = scalar_lea.vmem %s5, %s224
      %v227 = vld [vmem:[%s221] sm:$0xf]
      %v228 = vld [vmem:[%s221 + $0x4] sm:$0xf]
      %v229 = vld [vmem:[%s221 + $0x8] sm:$0xf]
      %v230 = vld [vmem:[%s221 + $0xc] sm:$0xf]
      %v231 = vld [vmem:[%s221 + $0x10] sm:$0xf]
      %v232 = vld [vmem:[%s221 + $0x14] sm:$0xf]
      %v233 = vld [vmem:[%s221 + $0x18] sm:$0xf]
      %v234 = vld [vmem:[%s221 + $0x1c] sm:$0xf]
      %v235 = vld [vmem:[%s221 + $0x20] sm:$0xf]
      %v236 = vld [vmem:[%s221 + $0x24] sm:$0xf]
      %v237 = vld [vmem:[%s221 + $0x28] sm:$0xf]
      %v238 = vld [vmem:[%s221 + $0x2c] sm:$0xf]
      %v239 = vld [vmem:[%s1] sm:$0xff]
      %v240 = vld [vmem:[%s1 + $0x8] sm:$0xff]
      %v241 = vld [vmem:[%s1 + $0x10] sm:$0xff]
      %v242 = vld [vmem:[%s1 + $0x18] sm:$0xff]
      %v243 = vld [vmem:[%s1 + $0x20] sm:$0xff]
      %v244 = vld [vmem:[%s1 + $0x28] sm:$0xff]
      %v245 = vld [vmem:[%s1 + $0x30] sm:$0xff]
      %v246 = vld [vmem:[%s1 + $0x38] sm:$0xff]
      %v247 = vld [vmem:[%s1 + $0x40] sm:$0xff]
      %v248 = vld [vmem:[%s1 + $0x48] sm:$0xff]
      %v249 = vld [vmem:[%s1 + $0x50] sm:$0xff]
      %v250 = vld [vmem:[%s1 + $0x58] sm:$0xff]
      %v251 = vld [vmem:[%s1 + $0x60] sm:$0xff]
      %v252 = vld [vmem:[%s1 + $0x68] sm:$0xff]
      %v253 = vld [vmem:[%s1 + $0x70] sm:$0xff]
      %v254 = vld [vmem:[%s1 + $0x78] sm:$0xff]
      %vm267 = vcmask 1042432
      %vm268 = vcmask 1046532
      %vm269 = vmor %vm267, %vm268
      %v270 = vrot.slane %v227, 5
      %v271 = vrot.slane %v270, 4
      %v272 = vrot.slane %v228, 5
      %v273 = vsel %vm269, %v271, %v272
      %v274 = vrot.slane %v272, 4
      %v275 = vrot.slane %v229, 5
      %v276 = vsel %vm269, %v274, %v275
      %v277 = vrot.slane %v230, 5
      %v278 = vrot.slane %v277, 4
      %v279 = vrot.slane %v231, 5
      %v280 = vsel %vm269, %v278, %v279
      %v281 = vrot.slane %v279, 4
      %v282 = vrot.slane %v232, 5
      %v283 = vsel %vm269, %v281, %v282
      %v284 = vrot.slane %v233, 5
      %v285 = vrot.slane %v284, 4
      %v286 = vrot.slane %v234, 5
      %v287 = vsel %vm269, %v285, %v286
      %v288 = vrot.slane %v286, 4
      %v289 = vrot.slane %v235, 5
      %v290 = vsel %vm269, %v288, %v289
      %v291 = vrot.slane %v236, 5
      %v292 = vrot.slane %v291, 4
      %v293 = vrot.slane %v237, 5
      %v294 = vsel %vm269, %v292, %v293
      %v295 = vrot.slane %v293, 4
      %v296 = vrot.slane %v238, 5
      %v297 = vsel %vm269, %v295, %v296
      %s298 = scalar_lea.vmem %s1, 128
      %v299 = vld [vmem:[%s298] sm:$0xff]
      %v300 = vld [vmem:[%s298 + $0x8] sm:$0xff]
      %v301 = vld [vmem:[%s298 + $0x10] sm:$0xff]
      %v302 = vld [vmem:[%s298 + $0x18] sm:$0xff]
      %v303 = vld [vmem:[%s298 + $0x20] sm:$0xff]
      %v304 = vld [vmem:[%s298 + $0x28] sm:$0xff]
      %v305 = vld [vmem:[%s298 + $0x30] sm:$0xff]
      %v306 = vld [vmem:[%s298 + $0x38] sm:$0xff]
      %v307 = vld [vmem:[%s298 + $0x40] sm:$0xff]
      %v308 = vld [vmem:[%s298 + $0x48] sm:$0xff]
      %v309 = vld [vmem:[%s298 + $0x50] sm:$0xff]
      %v310 = vld [vmem:[%s298 + $0x58] sm:$0xff]
      %v311 = vld [vmem:[%s298 + $0x60] sm:$0xff]
      %v312 = vld [vmem:[%s298 + $0x68] sm:$0xff]
      %v313 = vld [vmem:[%s298 + $0x70] sm:$0xff]
      %v314 = vld [vmem:[%s298 + $0x78] sm:$0xff]
      %v315 = vunpack.c.l.b16 %v273
      %v316 = vunpack.c.l.b16 %v276
      %v317 = vunpack.c.l.b16 %v280
      %v318 = vunpack.c.l.b16 %v283
      %v319 = vunpack.c.l.b16 %v287
      %v320 = vunpack.c.l.b16 %v290
      %v321 = vunpack.c.l.b16 %v294
      %v322 = vunpack.c.l.b16 %v297
      %v323 = vpack.c.b16 %v316, %v315
      %v324 = vpack.c.b16 %v318, %v317
      %v325 = vpack.c.b16 %v320, %v319
      %v326 = vpack.c.b16 %v322, %v321
      %v347 = vunpack.c.l.b16 %v299
      %v348 = vunpack.c.h.b16 %v299
      %v349 = vunpack.c.l.b16 %v300
      %v350 = vunpack.c.h.b16 %v300
      %v351 = vunpack.c.l.b16 %v301
      %v352 = vunpack.c.h.b16 %v301
      %v353 = vunpack.c.l.b16 %v302
      %v354 = vunpack.c.h.b16 %v302
      %v355 = vunpack.c.l.b16 %v303
      %v356 = vunpack.c.h.b16 %v303
      %v357 = vunpack.c.l.b16 %v304
      %v358 = vunpack.c.h.b16 %v304
      %v359 = vunpack.c.l.b16 %v305
      %v360 = vunpack.c.h.b16 %v305
      %v361 = vunpack.c.l.b16 %v306
      %v362 = vunpack.c.h.b16 %v306
      %v363 = vunpack.c.l.b16 %v307
      %v364 = vunpack.c.h.b16 %v307
      %v365 = vunpack.c.l.b16 %v308
      %v366 = vunpack.c.h.b16 %v308
      %v367 = vunpack.c.l.b16 %v309
      %v368 = vunpack.c.h.b16 %v309
      %v369 = vunpack.c.l.b16 %v310
      %v370 = vunpack.c.h.b16 %v310
      %v371 = vunpack.c.l.b16 %v311
      %v372 = vunpack.c.h.b16 %v311
      %v373 = vunpack.c.l.b16 %v312
      %v374 = vunpack.c.h.b16 %v312
      %v375 = vunpack.c.l.b16 %v313
      %v376 = vunpack.c.h.b16 %v313
      %v377 = vunpack.c.l.b16 %v314
      %v378 = vunpack.c.h.b16 %v314
      %v379 = vpack.c.b16 %v349, %v347
      %v380 = vpack.c.b16 %v350, %v348
      %v381 = vpack.c.b16 %v353, %v351
      %v382 = vpack.c.b16 %v354, %v352
      %v383 = vpack.c.b16 %v357, %v355
      %v384 = vpack.c.b16 %v358, %v356
      %v385 = vpack.c.b16 %v361, %v359
      %v386 = vpack.c.b16 %v362, %v360
      %v387 = vpack.c.b16 %v365, %v363
      %v388 = vpack.c.b16 %v366, %v364
      %v389 = vpack.c.b16 %v369, %v367
      %v390 = vpack.c.b16 %v370, %v368
      %v391 = vpack.c.b16 %v373, %v371
      %v392 = vpack.c.b16 %v374, %v372
      %v393 = vpack.c.b16 %v377, %v375
      %v394 = vpack.c.b16 %v378, %v376
      %411 = vmatprep.subr.bf16.mxu0 %v380
      %412 = vmatpush1.bf16.msra.mxu0 %v379
      %413 = vmatprep.subr.bf16.mxu0 %v382
      %414 = vmatpush1.bf16.msra.mxu0 %v381
      %415 = vmatprep.subr.bf16.mxu0 %v384
      %416 = vmatpush1.bf16.msra.mxu0 %v383
      %417 = vmatprep.subr.bf16.mxu0 %v386
      %418 = vmatpush1.bf16.msra.mxu0 %v385
      %419 = vmatprep.subr.bf16.mxu0 %v388
      %420 = vmatpush1.bf16.msra.mxu0 %v387
      %421 = vmatprep.subr.bf16.mxu0 %v390
      %422 = vmatpush1.bf16.msra.mxu0 %v389
      %423 = vmatprep.subr.bf16.mxu0 %v392
      %424 = vmatpush1.bf16.msra.mxu0 %v391
      %425 = vmatprep.subr.bf16.mxu0 %v394
      %426 = vmatpush1.bf16.msra.mxu0 %v393
      %427 = vmatprep.subr.bf16.mxu0 0
      %428 = vmatpush1.bf16.msra.mxu0 0
      %429 = vmatprep.subr.bf16.mxu0 0
      %430 = vmatpush1.bf16.msra.mxu0 0
      %431 = vmatprep.subr.bf16.mxu0 0
      %432 = vmatpush1.bf16.msra.mxu0 0
      %433 = vmatprep.subr.bf16.mxu0 0
      %434 = vmatpush1.bf16.msra.mxu0 0
      %435 = vmatprep.subr.bf16.mxu0 0
      %436 = vmatpush1.bf16.msra.mxu0 0
      %437 = vmatprep.subr.bf16.mxu0 0
      %438 = vmatpush1.bf16.msra.mxu0 0
      %439 = vmatprep.subr.bf16.mxu0 0
      %440 = vmatpush1.bf16.msra.mxu0 0
      %441 = vmatprep.subr.bf16.mxu0 0
      %442 = vmatpush1.bf16.msra.mxu0 0
      %443 = vmatprep.mubr.bf16.mxu0 0
      %444 = vmatmul.mubr.bf16.gmra.mrb[0].mxu0 %v323
      %v445 = vpop.f32.mrb[0].mxu0
      %v446 = vadd.f32 0.0, %v445
      %v447 = vpop.f32.mrb[0].mxu0
      %v448 = vadd.f32 0.0, %v447
      %v449 = vpop.f32.mrb[0].mxu0
      %v450 = vadd.f32 0.0, %v449
      %v451 = vpop.f32.mrb[0].mxu0
      %v452 = vadd.f32 0.0, %v451
      %453 = vmatprep.mubr.bf16.mxu0 0
      %454 = vmatmul.mubr.bf16.gmra.mrb[0].mxu0 %v324
      %v455 = vpop.f32.mrb[0].mxu0
      %v456 = vadd.f32 0.0, %v455
      %v457 = vpop.f32.mrb[0].mxu0
      %v458 = vadd.f32 0.0, %v457
      %v459 = vpop.f32.mrb[0].mxu0
      %v460 = vadd.f32 0.0, %v459
      %v461 = vpop.f32.mrb[0].mxu0
      %v462 = vadd.f32 0.0, %v461
      %463 = vmatprep.mubr.bf16.mxu0 0
      %464 = vmatmul.mubr.bf16.gmra.mrb[0].mxu0 %v325
      %v465 = vpop.f32.mrb[0].mxu0
      %v466 = vadd.f32 0.0, %v465
      %v467 = vpop.f32.mrb[0].mxu0
      %v468 = vadd.f32 0.0, %v467
      %v469 = vpop.f32.mrb[0].mxu0
      %v470 = vadd.f32 0.0, %v469
      %v471 = vpop.f32.mrb[0].mxu0
      %v472 = vadd.f32 0.0, %v471
      %473 = vmatprep.mubr.bf16.mxu0 0
      %474 = vmatmul.mubr.bf16.gmra.mrb[0].mxu0 %v326
      %v475 = vpop.f32.mrb[0].mxu0
      %v476 = vadd.f32 0.0, %v475
      %v477 = vpop.f32.mrb[0].mxu0
      %v478 = vadd.f32 0.0, %v477
      %v479 = vpop.f32.mrb[0].mxu0
      %v480 = vadd.f32 0.0, %v479
      %v481 = vpop.f32.mrb[0].mxu0
      %v482 = vadd.f32 0.0, %v481
      %483 = vdwg.mxu0
      %v484 = vunpack.c.l.b16 %v227
      %v485 = vunpack.c.l.b16 %v228
      %v486 = vunpack.c.l.b16 %v230
      %v487 = vunpack.c.l.b16 %v231
      %v488 = vunpack.c.l.b16 %v233
      %v489 = vunpack.c.l.b16 %v234
      %v490 = vunpack.c.l.b16 %v236
      %v491 = vunpack.c.l.b16 %v237
      %v492 = vpack.c.b16 %v485, %v484
      %v493 = vpack.c.b16 %v487, %v486
      %v494 = vpack.c.b16 %v489, %v488
      %v495 = vpack.c.b16 %v491, %v490
      %v516 = vunpack.c.l.b16 %v239
      %v517 = vunpack.c.h.b16 %v239
      %v518 = vunpack.c.l.b16 %v240
      %v519 = vunpack.c.h.b16 %v240
      %v520 = vunpack.c.l.b16 %v241
      %v521 = vunpack.c.h.b16 %v241
      %v522 = vunpack.c.l.b16 %v242
      %v523 = vunpack.c.h.b16 %v242
      %v524 = vunpack.c.l.b16 %v243
      %v525 = vunpack.c.h.b16 %v243
      %v526 = vunpack.c.l.b16 %v244
      %v527 = vunpack.c.h.b16 %v244
      %v528 = vunpack.c.l.b16 %v245
      %v529 = vunpack.c.h.b16 %v245
      %v530 = vunpack.c.l.b16 %v246
      %v531 = vunpack.c.h.b16 %v246
      %v532 = vunpack.c.l.b16 %v247
      %v533 = vunpack.c.h.b16 %v247
      %v534 = vunpack.c.l.b16 %v248
      %v535 = vunpack.c.h.b16 %v248
      %v536 = vunpack.c.l.b16 %v249
      %v537 = vunpack.c.h.b16 %v249
      %v538 = vunpack.c.l.b16 %v250
      %v539 = vunpack.c.h.b16 %v250
      %v540 = vunpack.c.l.b16 %v251
      %v541 = vunpack.c.h.b16 %v251
      %v542 = vunpack.c.l.b16 %v252
      %v543 = vunpack.c.h.b16 %v252
      %v544 = vunpack.c.l.b16 %v253
      %v545 = vunpack.c.h.b16 %v253
      %v546 = vunpack.c.l.b16 %v254
      %v547 = vunpack.c.h.b16 %v254
      %v548 = vpack.c.b16 %v518, %v516
      %v549 = vpack.c.b16 %v519, %v517
      %v550 = vpack.c.b16 %v522, %v520
      %v551 = vpack.c.b16 %v523, %v521
      %v552 = vpack.c.b16 %v526, %v524
      %v553 = vpack.c.b16 %v527, %v525
      %v554 = vpack.c.b16 %v530, %v528
      %v555 = vpack.c.b16 %v531, %v529
      %v556 = vpack.c.b16 %v534, %v532
      %v557 = vpack.c.b16 %v535, %v533
      %v558 = vpack.c.b16 %v538, %v536
      %v559 = vpack.c.b16 %v539, %v537
      %v560 = vpack.c.b16 %v542, %v540
      %v561 = vpack.c.b16 %v543, %v541
      %v562 = vpack.c.b16 %v546, %v544
      %v563 = vpack.c.b16 %v547, %v545
      %580 = vmatprep.subr.bf16.mxu0 %v549
      %581 = vmatpush1.bf16.msra.mxu0 %v548
      %582 = vmatprep.subr.bf16.mxu0 %v551
      %583 = vmatpush1.bf16.msra.mxu0 %v550
      %584 = vmatprep.subr.bf16.mxu0 %v553
      %585 = vmatpush1.bf16.msra.mxu0 %v552
      %586 = vmatprep.subr.bf16.mxu0 %v555
      %587 = vmatpush1.bf16.msra.mxu0 %v554
      %588 = vmatprep.subr.bf16.mxu0 %v557
      %589 = vmatpush1.bf16.msra.mxu0 %v556
      %590 = vmatprep.subr.bf16.mxu0 %v559
      %591 = vmatpush1.bf16.msra.mxu0 %v558
      %592 = vmatprep.subr.bf16.mxu0 %v561
      %593 = vmatpush1.bf16.msra.mxu0 %v560
      %594 = vmatprep.subr.bf16.mxu0 %v563
      %595 = vmatpush1.bf16.msra.mxu0 %v562
      %596 = vmatprep.subr.bf16.mxu0 0
      %597 = vmatpush1.bf16.msra.mxu0 0
      %598 = vmatprep.subr.bf16.mxu0 0
      %599 = vmatpush1.bf16.msra.mxu0 0
      %600 = vmatprep.subr.bf16.mxu0 0
      %601 = vmatpush1.bf16.msra.mxu0 0
      %602 = vmatprep.subr.bf16.mxu0 0
      %603 = vmatpush1.bf16.msra.mxu0 0
      %604 = vmatprep.subr.bf16.mxu0 0
      %605 = vmatpush1.bf16.msra.mxu0 0
      %606 = vmatprep.subr.bf16.mxu0 0
      %607 = vmatpush1.bf16.msra.mxu0 0
      %608 = vmatprep.subr.bf16.mxu0 0
      %609 = vmatpush1.bf16.msra.mxu0 0
      %610 = vmatprep.subr.bf16.mxu0 0
      %611 = vmatpush1.bf16.msra.mxu0 0
      %612 = vmatprep.mubr.bf16.mxu0 0
      %613 = vmatmul.mubr.bf16.gmra.mrb[0].mxu0 %v492
      %v614 = vpop.f32.mrb[0].mxu0
      %v615 = vadd.f32 %v446, %v614
      %v616 = vpop.f32.mrb[0].mxu0
      %v617 = vadd.f32 %v448, %v616
      %v618 = vpop.f32.mrb[0].mxu0
      %v619 = vadd.f32 %v450, %v618
      %v620 = vpop.f32.mrb[0].mxu0
      %v621 = vadd.f32 %v452, %v620
      %622 = vmatprep.mubr.bf16.mxu0 0
      %623 = vmatmul.mubr.bf16.gmra.mrb[0].mxu0 %v493
      %v624 = vpop.f32.mrb[0].mxu0
      %v625 = vadd.f32 %v456, %v624
      %v626 = vpop.f32.mrb[0].mxu0
      %v627 = vadd.f32 %v458, %v626
      %v628 = vpop.f32.mrb[0].mxu0
      %v629 = vadd.f32 %v460, %v628
      %v630 = vpop.f32.mrb[0].mxu0
      %v631 = vadd.f32 %v462, %v630
      %632 = vmatprep.mubr.bf16.mxu0 0
      %633 = vmatmul.mubr.bf16.gmra.mrb[0].mxu0 %v494
      %v634 = vpop.f32.mrb[0].mxu0
      %v635 = vadd.f32 %v466, %v634
      %v636 = vpop.f32.mrb[0].mxu0
      %v637 = vadd.f32 %v468, %v636
      %v638 = vpop.f32.mrb[0].mxu0
      %v639 = vadd.f32 %v470, %v638
      %v640 = vpop.f32.mrb[0].mxu0
      %v641 = vadd.f32 %v472, %v640
      %642 = vmatprep.mubr.bf16.mxu0 0
      %643 = vmatmul.mubr.bf16.gmra.mrb[0].mxu0 %v495
      %v644 = vpop.f32.mrb[0].mxu0
      %v645 = vadd.f32 %v476, %v644
      %v646 = vpop.f32.mrb[0].mxu0
      %v647 = vadd.f32 %v478, %v646
      %v648 = vpop.f32.mrb[0].mxu0
      %v649 = vadd.f32 %v480, %v648
      %v650 = vpop.f32.mrb[0].mxu0
      %v651 = vadd.f32 %v482, %v650
      %652 = vdwg.mxu0
      %vm653 = vcmask 1041408
      %vm654 = vcmask 1045508
      %vm655 = vmor %vm653, %vm654
      %v656 = vrot.slane %v227, 6
      %v657 = vrot.slane %v656, 4
      %v658 = vrot.slane %v228, 6
      %v659 = vsel %vm655, %v657, %v658
      %v660 = vrot.slane %v658, 4
      %v661 = vrot.slane %v229, 6
      %v662 = vsel %vm655, %v660, %v661
      %v663 = vrot.slane %v230, 6
      %v664 = vrot.slane %v663, 4
      %v665 = vrot.slane %v231, 6
      %v666 = vsel %vm655, %v664, %v665
      %v667 = vrot.slane %v665, 4
      %v668 = vrot.slane %v232, 6
      %v669 = vsel %vm655, %v667, %v668
      %v670 = vrot.slane %v233, 6
      %v671 = vrot.slane %v670, 4
      %v672 = vrot.slane %v234, 6
      %v673 = vsel %vm655, %v671, %v672
      %v674 = vrot.slane %v672, 4
      %v675 = vrot.slane %v235, 6
      %v676 = vsel %vm655, %v674, %v675
      %v677 = vrot.slane %v236, 6
      %v678 = vrot.slane %v677, 4
      %v679 = vrot.slane %v237, 6
      %v680 = vsel %vm655, %v678, %v679
      %v681 = vrot.slane %v679, 4
      %v682 = vrot.slane %v238, 6
      %v683 = vsel %vm655, %v681, %v682
      %s684 = scalar_lea.vmem %s1, 256
      %v685 = vld [vmem:[%s684] sm:$0xff]
      %v686 = vld [vmem:[%s684 + $0x8] sm:$0xff]
      %v687 = vld [vmem:[%s684 + $0x10] sm:$0xff]
      %v688 = vld [vmem:[%s684 + $0x18] sm:$0xff]
      %v689 = vld [vmem:[%s684 + $0x20] sm:$0xff]
      %v690 = vld [vmem:[%s684 + $0x28] sm:$0xff]
      %v691 = vld [vmem:[%s684 + $0x30] sm:$0xff]
      %v692 = vld [vmem:[%s684 + $0x38] sm:$0xff]
      %v693 = vld [vmem:[%s684 + $0x40] sm:$0xff]
      %v694 = vld [vmem:[%s684 + $0x48] sm:$0xff]
      %v695 = vld [vmem:[%s684 + $0x50] sm:$0xff]
      %v696 = vld [vmem:[%s684 + $0x58] sm:$0xff]
      %v697 = vld [vmem:[%s684 + $0x60] sm:$0xff]
      %v698 = vld [vmem:[%s684 + $0x68] sm:$0xff]
      %v699 = vld [vmem:[%s684 + $0x70] sm:$0xff]
      %v700 = vld [vmem:[%s684 + $0x78] sm:$0xff]
      %v701 = vunpack.c.l.b16 %v659
      %v702 = vunpack.c.l.b16 %v662
      %v703 = vunpack.c.l.b16 %v666
      %v704 = vunpack.c.l.b16 %v669
      %v705 = vunpack.c.l.b16 %v673
      %v706 = vunpack.c.l.b16 %v676
      %v707 = vunpack.c.l.b16 %v680
      %v708 = vunpack.c.l.b16 %v683
      %v709 = vpack.c.b16 %v702, %v701
      %v710 = vpack.c.b16 %v704, %v703
      %v711 = vpack.c.b16 %v706, %v705
      %v712 = vpack.c.b16 %v708, %v707
      %v733 = vunpack.c.l.b16 %v685
      %v734 = vunpack.c.h.b16 %v685
      %v735 = vunpack.c.l.b16 %v686
      %v736 = vunpack.c.h.b16 %v686
      %v737 = vunpack.c.l.b16 %v687
      %v738 = vunpack.c.h.b16 %v687
      %v739 = vunpack.c.l.b16 %v688
      %v740 = vunpack.c.h.b16 %v688
      %v741 = vunpack.c.l.b16 %v689
      %v742 = vunpack.c.h.b16 %v689
      %v743 = vunpack.c.l.b16 %v690
      %v744 = vunpack.c.h.b16 %v690
      %v745 = vunpack.c.l.b16 %v691
      %v746 = vunpack.c.h.b16 %v691
      %v747 = vunpack.c.l.b16 %v692
      %v748 = vunpack.c.h.b16 %v692
      %v749 = vunpack.c.l.b16 %v693
      %v750 = vunpack.c.h.b16 %v693
      %v751 = vunpack.c.l.b16 %v694
      %v752 = vunpack.c.h.b16 %v694
      %v753 = vunpack.c.l.b16 %v695
      %v754 = vunpack.c.h.b16 %v695
      %v755 = vunpack.c.l.b16 %v696
      %v756 = vunpack.c.h.b16 %v696
      %v757 = vunpack.c.l.b16 %v697
      %v758 = vunpack.c.h.b16 %v697
      %v759 = vunpack.c.l.b16 %v698
      %v760 = vunpack.c.h.b16 %v698
      %v761 = vunpack.c.l.b16 %v699
      %v762 = vunpack.c.h.b16 %v699
      %v763 = vunpack.c.l.b16 %v700
      %v764 = vunpack.c.h.b16 %v700
      %v765 = vpack.c.b16 %v735, %v733
      %v766 = vpack.c.b16 %v736, %v734
      %v767 = vpack.c.b16 %v739, %v737
      %v768 = vpack.c.b16 %v740, %v738
      %v769 = vpack.c.b16 %v743, %v741
      %v770 = vpack.c.b16 %v744, %v742
      %v771 = vpack.c.b16 %v747, %v745
      %v772 = vpack.c.b16 %v748, %v746
      %v773 = vpack.c.b16 %v751, %v749
      %v774 = vpack.c.b16 %v752, %v750
      %v775 = vpack.c.b16 %v755, %v753
      %v776 = vpack.c.b16 %v756, %v754
      %v777 = vpack.c.b16 %v759, %v757
      %v778 = vpack.c.b16 %v760, %v758
      %v779 = vpack.c.b16 %v763, %v761
      %v780 = vpack.c.b16 %v764, %v762
      %797 = vmatprep.subr.bf16.mxu0 %v766
      %798 = vmatpush1.bf16.msra.mxu0 %v765
      %799 = vmatprep.subr.bf16.mxu0 %v768
      %800 = vmatpush1.bf16.msra.mxu0 %v767
      %801 = vmatprep.subr.bf16.mxu0 %v770
      %802 = vmatpush1.bf16.msra.mxu0 %v769
      %803 = vmatprep.subr.bf16.mxu0 %v772
      %804 = vmatpush1.bf16.msra.mxu0 %v771
      %805 = vmatprep.subr.bf16.mxu0 %v774
      %806 = vmatpush1.bf16.msra.mxu0 %v773
      %807 = vmatprep.subr.bf16.mxu0 %v776
      %808 = vmatpush1.bf16.msra.mxu0 %v775
      %809 = vmatprep.subr.bf16.mxu0 %v778
      %810 = vmatpush1.bf16.msra.mxu0 %v777
      %811 = vmatprep.subr.bf16.mxu0 %v780
      %812 = vmatpush1.bf16.msra.mxu0 %v779
      %813 = vmatprep.subr.bf16.mxu0 0
      %814 = vmatpush1.bf16.msra.mxu0 0
      %815 = vmatprep.subr.bf16.mxu0 0
      %816 = vmatpush1.bf16.msra.mxu0 0
      %817 = vmatprep.subr.bf16.mxu0 0
      %818 = vmatpush1.bf16.msra.mxu0 0
      %819 = vmatprep.subr.bf16.mxu0 0
      %820 = vmatpush1.bf16.msra.mxu0 0
      %821 = vmatprep.subr.bf16.mxu0 0
      %822 = vmatpush1.bf16.msra.mxu0 0
      %823 = vmatprep.subr.bf16.mxu0 0
      %824 = vmatpush1.bf16.msra.mxu0 0
      %825 = vmatprep.subr.bf16.mxu0 0
      %826 = vmatpush1.bf16.msra.mxu0 0
      %827 = vmatprep.subr.bf16.mxu0 0
      %828 = vmatpush1.bf16.msra.mxu0 0
      %829 = vmatprep.mubr.bf16.mxu0 0
      %830 = vmatmul.mubr.bf16.gmra.mrb[0].mxu0 %v709
      %v831 = vpop.f32.mrb[0].mxu0
      %v832 = vadd.f32 0.0, %v831
      %v833 = vpop.f32.mrb[0].mxu0
      %v834 = vadd.f32 0.0, %v833
      %v835 = vpop.f32.mrb[0].mxu0
      %v836 = vadd.f32 0.0, %v835
      %v837 = vpop.f32.mrb[0].mxu0
      %v838 = vadd.f32 0.0, %v837
      %839 = vmatprep.mubr.bf16.mxu0 0
      %840 = vmatmul.mubr.bf16.gmra.mrb[0].mxu0 %v710
      %v841 = vpop.f32.mrb[0].mxu0
      %v842 = vadd.f32 0.0, %v841
      %v843 = vpop.f32.mrb[0].mxu0
      %v844 = vadd.f32 0.0, %v843
      %v845 = vpop.f32.mrb[0].mxu0
      %v846 = vadd.f32 0.0, %v845
      %v847 = vpop.f32.mrb[0].mxu0
      %v848 = vadd.f32 0.0, %v847
      %849 = vmatprep.mubr.bf16.mxu0 0
      %850 = vmatmul.mubr.bf16.gmra.mrb[0].mxu0 %v711
      %v851 = vpop.f32.mrb[0].mxu0
      %v852 = vadd.f32 0.0, %v851
      %v853 = vpop.f32.mrb[0].mxu0
      %v854 = vadd.f32 0.0, %v853
      %v855 = vpop.f32.mrb[0].mxu0
      %v856 = vadd.f32 0.0, %v855
      %v857 = vpop.f32.mrb[0].mxu0
      %v858 = vadd.f32 0.0, %v857
      %859 = vmatprep.mubr.bf16.mxu0 0
      %860 = vmatmul.mubr.bf16.gmra.mrb[0].mxu0 %v712
      %v861 = vpop.f32.mrb[0].mxu0
      %v862 = vadd.f32 0.0, %v861
      %v863 = vpop.f32.mrb[0].mxu0
      %v864 = vadd.f32 0.0, %v863
      %v865 = vpop.f32.mrb[0].mxu0
      %v866 = vadd.f32 0.0, %v865
      %v867 = vpop.f32.mrb[0].mxu0
      %v868 = vadd.f32 0.0, %v867
      %869 = vdwg.mxu0
      %v870 = vadd.f32 %v615, %v832
      %v871 = vadd.f32 %v617, %v834
      %v872 = vadd.f32 %v619, %v836
      %v873 = vadd.f32 %v621, %v838
      %v874 = vadd.f32 %v625, %v842
      %v875 = vadd.f32 %v627, %v844
      %v876 = vadd.f32 %v629, %v846
      %v877 = vadd.f32 %v631, %v848
      %v878 = vadd.f32 %v635, %v852
      %v879 = vadd.f32 %v637, %v854
      %v880 = vadd.f32 %v639, %v856
      %v881 = vadd.f32 %v641, %v858
      %v882 = vadd.f32 %v645, %v862
      %v883 = vadd.f32 %v647, %v864
      %v884 = vadd.f32 %v649, %v866
      %v885 = vadd.f32 %v651, %v868
      %vm886 = vcmask 1040384
      %vm887 = vcmask 1044484
      %vm888 = vmor %vm886, %vm887
      %v889 = vrot.slane %v227, 7
      %v890 = vrot.slane %v889, 4
      %v891 = vrot.slane %v228, 7
      %v892 = vsel %vm888, %v890, %v891
      %v893 = vrot.slane %v891, 4
      %v894 = vrot.slane %v229, 7
      %v895 = vsel %vm888, %v893, %v894
      %v896 = vrot.slane %v230, 7
      %v897 = vrot.slane %v896, 4
      %v898 = vrot.slane %v231, 7
      %v899 = vsel %vm888, %v897, %v898
      %v900 = vrot.slane %v898, 4
      %v901 = vrot.slane %v232, 7
      %v902 = vsel %vm888, %v900, %v901
      %v903 = vrot.slane %v233, 7
      %v904 = vrot.slane %v903, 4
      %v905 = vrot.slane %v234, 7
      %v906 = vsel %vm888, %v904, %v905
      %v907 = vrot.slane %v905, 4
      %v908 = vrot.slane %v235, 7
      %v909 = vsel %vm888, %v907, %v908
      %v910 = vrot.slane %v236, 7
      %v911 = vrot.slane %v910, 4
      %v912 = vrot.slane %v237, 7
      %v913 = vsel %vm888, %v911, %v912
      %v914 = vrot.slane %v912, 4
      %v915 = vrot.slane %v238, 7
      %v916 = vsel %vm888, %v914, %v915
      %s917 = scalar_lea.vmem %s1, 384
      %v918 = vld [vmem:[%s917] sm:$0xff]
      %v919 = vld [vmem:[%s917 + $0x8] sm:$0xff]
      %v920 = vld [vmem:[%s917 + $0x10] sm:$0xff]
      %v921 = vld [vmem:[%s917 + $0x18] sm:$0xff]
      %v922 = vld [vmem:[%s917 + $0x20] sm:$0xff]
      %v923 = vld [vmem:[%s917 + $0x28] sm:$0xff]
      %v924 = vld [vmem:[%s917 + $0x30] sm:$0xff]
      %v925 = vld [vmem:[%s917 + $0x38] sm:$0xff]
      %v926 = vld [vmem:[%s917 + $0x40] sm:$0xff]
      %v927 = vld [vmem:[%s917 + $0x48] sm:$0xff]
      %v928 = vld [vmem:[%s917 + $0x50] sm:$0xff]
      %v929 = vld [vmem:[%s917 + $0x58] sm:$0xff]
      %v930 = vld [vmem:[%s917 + $0x60] sm:$0xff]
      %v931 = vld [vmem:[%s917 + $0x68] sm:$0xff]
      %v932 = vld [vmem:[%s917 + $0x70] sm:$0xff]
      %v933 = vld [vmem:[%s917 + $0x78] sm:$0xff]
      %v934 = vunpack.c.l.b16 %v892
      %v935 = vunpack.c.l.b16 %v895
      %v936 = vunpack.c.l.b16 %v899
      %v937 = vunpack.c.l.b16 %v902
      %v938 = vunpack.c.l.b16 %v906
      %v939 = vunpack.c.l.b16 %v909
      %v940 = vunpack.c.l.b16 %v913
      %v941 = vunpack.c.l.b16 %v916
      %v942 = vpack.c.b16 %v935, %v934
      %v943 = vpack.c.b16 %v937, %v936
      %v944 = vpack.c.b16 %v939, %v938
      %v945 = vpack.c.b16 %v941, %v940
      %v966 = vunpack.c.l.b16 %v918
      %v967 = vunpack.c.h.b16 %v918
      %v968 = vunpack.c.l.b16 %v919
      %v969 = vunpack.c.h.b16 %v919
      %v970 = vunpack.c.l.b16 %v920
      %v971 = vunpack.c.h.b16 %v920
      %v972 = vunpack.c.l.b16 %v921
      %v973 = vunpack.c.h.b16 %v921
      %v974 = vunpack.c.l.b16 %v922
      %v975 = vunpack.c.h.b16 %v922
      %v976 = vunpack.c.l.b16 %v923
      %v977 = vunpack.c.h.b16 %v923
      %v978 = vunpack.c.l.b16 %v924
      %v979 = vunpack.c.h.b16 %v924
      %v980 = vunpack.c.l.b16 %v925
      %v981 = vunpack.c.h.b16 %v925
      %v982 = vunpack.c.l.b16 %v926
      %v983 = vunpack.c.h.b16 %v926
      %v984 = vunpack.c.l.b16 %v927
      %v985 = vunpack.c.h.b16 %v927
      %v986 = vunpack.c.l.b16 %v928
      %v987 = vunpack.c.h.b16 %v928
      %v988 = vunpack.c.l.b16 %v929
      %v989 = vunpack.c.h.b16 %v929
      %v990 = vunpack.c.l.b16 %v930
      %v991 = vunpack.c.h.b16 %v930
      %v992 = vunpack.c.l.b16 %v931
      %v993 = vunpack.c.h.b16 %v931
      %v994 = vunpack.c.l.b16 %v932
      %v995 = vunpack.c.h.b16 %v932
      %v996 = vunpack.c.l.b16 %v933
      %v997 = vunpack.c.h.b16 %v933
      %v998 = vpack.c.b16 %v968, %v966
      %v999 = vpack.c.b16 %v969, %v967
      %v1000 = vpack.c.b16 %v972, %v970
      %v1001 = vpack.c.b16 %v973, %v971
      %v1002 = vpack.c.b16 %v976, %v974
      %v1003 = vpack.c.b16 %v977, %v975
      %v1004 = vpack.c.b16 %v980, %v978
      %v1005 = vpack.c.b16 %v981, %v979
      %v1006 = vpack.c.b16 %v984, %v982
      %v1007 = vpack.c.b16 %v985, %v983
      %v1008 = vpack.c.b16 %v988, %v986
      %v1009 = vpack.c.b16 %v989, %v987
      %v1010 = vpack.c.b16 %v992, %v990
      %v1011 = vpack.c.b16 %v993, %v991
      %v1012 = vpack.c.b16 %v996, %v994
      %v1013 = vpack.c.b16 %v997, %v995
      %1030 = vmatprep.subr.bf16.mxu0 %v999
      %1031 = vmatpush1.bf16.msra.mxu0 %v998
      %1032 = vmatprep.subr.bf16.mxu0 %v1001
      %1033 = vmatpush1.bf16.msra.mxu0 %v1000
      %1034 = vmatprep.subr.bf16.mxu0 %v1003
      %1035 = vmatpush1.bf16.msra.mxu0 %v1002
      %1036 = vmatprep.subr.bf16.mxu0 %v1005
      %1037 = vmatpush1.bf16.msra.mxu0 %v1004
      %1038 = vmatprep.subr.bf16.mxu0 %v1007
      %1039 = vmatpush1.bf16.msra.mxu0 %v1006
      %1040 = vmatprep.subr.bf16.mxu0 %v1009
      %1041 = vmatpush1.bf16.msra.mxu0 %v1008
      %1042 = vmatprep.subr.bf16.mxu0 %v1011
      %1043 = vmatpush1.bf16.msra.mxu0 %v1010
      %1044 = vmatprep.subr.bf16.mxu0 %v1013
      %1045 = vmatpush1.bf16.msra.mxu0 %v1012
      %1046 = vmatprep.subr.bf16.mxu0 0
      %1047 = vmatpush1.bf16.msra.mxu0 0
      %1048 = vmatprep.subr.bf16.mxu0 0
      %1049 = vmatpush1.bf16.msra.mxu0 0
      %1050 = vmatprep.subr.bf16.mxu0 0
      %1051 = vmatpush1.bf16.msra.mxu0 0
      %1052 = vmatprep.subr.bf16.mxu0 0
      %1053 = vmatpush1.bf16.msra.mxu0 0
      %1054 = vmatprep.subr.bf16.mxu0 0
      %1055 = vmatpush1.bf16.msra.mxu0 0
      %1056 = vmatprep.subr.bf16.mxu0 0
      %1057 = vmatpush1.bf16.msra.mxu0 0
      %1058 = vmatprep.subr.bf16.mxu0 0
      %1059 = vmatpush1.bf16.msra.mxu0 0
      %1060 = vmatprep.subr.bf16.mxu0 0
      %1061 = vmatpush1.bf16.msra.mxu0 0
      %1062 = vmatprep.mubr.bf16.mxu0 0
      %1063 = vmatmul.mubr.bf16.gmra.mrb[0].mxu0 %v942
      %v1064 = vpop.f32.mrb[0].mxu0
      %v1065 = vadd.f32 0.0, %v1064
      %v1066 = vpop.f32.mrb[0].mxu0
      %v1067 = vadd.f32 0.0, %v1066
      %v1068 = vpop.f32.mrb[0].mxu0
      %v1069 = vadd.f32 0.0, %v1068
      %v1070 = vpop.f32.mrb[0].mxu0
      %v1071 = vadd.f32 0.0, %v1070
      %1072 = vmatprep.mubr.bf16.mxu0 0
      %1073 = vmatmul.mubr.bf16.gmra.mrb[0].mxu0 %v943
      %v1074 = vpop.f32.mrb[0].mxu0
      %v1075 = vadd.f32 0.0, %v1074
      %v1076 = vpop.f32.mrb[0].mxu0
      %v1077 = vadd.f32 0.0, %v1076
      %v1078 = vpop.f32.mrb[0].mxu0
      %v1079 = vadd.f32 0.0, %v1078
      %v1080 = vpop.f32.mrb[0].mxu0
      %v1081 = vadd.f32 0.0, %v1080
      %1082 = vmatprep.mubr.bf16.mxu0 0
      %1083 = vmatmul.mubr.bf16.gmra.mrb[0].mxu0 %v944
      %v1084 = vpop.f32.mrb[0].mxu0
      %v1085 = vadd.f32 0.0, %v1084
      %v1086 = vpop.f32.mrb[0].mxu0
      %v1087 = vadd.f32 0.0, %v1086
      %v1088 = vpop.f32.mrb[0].mxu0
      %v1089 = vadd.f32 0.0, %v1088
      %v1090 = vpop.f32.mrb[0].mxu0
      %v1091 = vadd.f32 0.0, %v1090
      %1092 = vmatprep.mubr.bf16.mxu0 0
      %1093 = vmatmul.mubr.bf16.gmra.mrb[0].mxu0 %v945
      %v1094 = vpop.f32.mrb[0].mxu0
      %v1095 = vadd.f32 0.0, %v1094
      %v1096 = vpop.f32.mrb[0].mxu0
      %v1097 = vadd.f32 0.0, %v1096
      %v1098 = vpop.f32.mrb[0].mxu0
      %v1099 = vadd.f32 0.0, %v1098
      %v1100 = vpop.f32.mrb[0].mxu0
      %v1101 = vadd.f32 0.0, %v1100
      %1102 = vdwg.mxu0
      %v1103 = vadd.f32 %v870, %v1065
      %v1104 = vadd.f32 %v871, %v1067
      %v1105 = vadd.f32 %v872, %v1069
      %v1106 = vadd.f32 %v873, %v1071
      %v1107 = vadd.f32 %v874, %v1075
      %v1108 = vadd.f32 %v875, %v1077
      %v1109 = vadd.f32 %v876, %v1079
      %v1110 = vadd.f32 %v877, %v1081
      %v1111 = vadd.f32 %v878, %v1085
      %v1112 = vadd.f32 %v879, %v1087
      %v1113 = vadd.f32 %v880, %v1089
      %v1114 = vadd.f32 %v881, %v1091
      %v1115 = vadd.f32 %v882, %v1095
      %v1116 = vadd.f32 %v883, %v1097
      %v1117 = vadd.f32 %v884, %v1099
      %v1118 = vadd.f32 %v885, %v1101
      %v1119 = vld [vmem:[%s2] sm:$0x3]
      %v1121 = vlaneseq
      %v1122 = vshrl.u32 %v1121, 7
      %v1123 = vsub.s32 0, %v1122
      %v1124 = vrot.slane %v1119, %v1123
      %v1125 = vlaneseq
      %v1126 = vshrl.u32 %v1125, 7
      %v1127 = vsub.s32 1, %v1126
      %v1128 = vrot.slane %v1119, %v1127
      %v1131 = vadd.f32 %v1103, %v1124
      %v1132 = vadd.f32 %v1104, %v1128
      %v1133 = vadd.f32 %v1105, %v1124
      %v1134 = vadd.f32 %v1106, %v1128
      %v1135 = vadd.f32 %v1107, %v1124
      %v1136 = vadd.f32 %v1108, %v1128
      %v1137 = vadd.f32 %v1109, %v1124
      %v1138 = vadd.f32 %v1110, %v1128
      %v1139 = vadd.f32 %v1111, %v1124
      %v1140 = vadd.f32 %v1112, %v1128
      %v1141 = vadd.f32 %v1113, %v1124
      %v1142 = vadd.f32 %v1114, %v1128
      %v1143 = vadd.f32 %v1115, %v1124
      %v1144 = vadd.f32 %v1116, %v1128
      %v1145 = vadd.f32 %v1117, %v1124
      %v1146 = vadd.f32 %v1118, %v1128
      %v1147 = vmax.f32 %v1131, 0.0
      %v1148 = vmax.f32 %v1132, 0.0
      %v1149 = vmax.f32 %v1133, 0.0
      %v1150 = vmax.f32 %v1134, 0.0
      %v1151 = vmax.f32 %v1135, 0.0
      %v1152 = vmax.f32 %v1136, 0.0
      %v1153 = vmax.f32 %v1137, 0.0
      %v1154 = vmax.f32 %v1138, 0.0
      %v1155 = vmax.f32 %v1139, 0.0
      %v1156 = vmax.f32 %v1140, 0.0
      %v1157 = vmax.f32 %v1141, 0.0
      %v1158 = vmax.f32 %v1142, 0.0
      %v1159 = vmax.f32 %v1143, 0.0
      %v1160 = vmax.f32 %v1144, 0.0
      %v1161 = vmax.f32 %v1145, 0.0
      %v1162 = vmax.f32 %v1146, 0.0
      %v1163 = vpack.c.bf16 %v1149, %v1147
      %v1164 = vpack.c.bf16 %v1150, %v1148
      %v1165 = vpack.c.bf16 %v1153, %v1151
      %v1166 = vpack.c.bf16 %v1154, %v1152
      %v1167 = vpack.c.bf16 %v1157, %v1155
      %v1168 = vpack.c.bf16 %v1158, %v1156
      %v1169 = vpack.c.bf16 %v1161, %v1159
      %v1170 = vpack.c.bf16 %v1162, %v1160
      %v1179 = vunpack.c.l.b16 %v1163
      %v1180 = vunpack.c.l.b16 %v1164
      %v1181 = vunpack.c.l.b16 %v1165
      %v1182 = vunpack.c.l.b16 %v1166
      %v1183 = vunpack.c.l.b16 %v1167
      %v1184 = vunpack.c.l.b16 %v1168
      %v1185 = vunpack.c.l.b16 %v1169
      %v1186 = vunpack.c.l.b16 %v1170
      %v1187 = vld [vmem:[%s3] sm:$0xff]
      %v1188 = vld [vmem:[%s3 + $0x8] sm:$0xff]
      %v1189 = vld [vmem:[%s3 + $0x10] sm:$0xff]
      %v1190 = vld [vmem:[%s3 + $0x18] sm:$0xff]
      %v1191 = vld [vmem:[%s3 + $0x20] sm:$0xff]
      %v1192 = vld [vmem:[%s3 + $0x28] sm:$0xff]
      %v1193 = vld [vmem:[%s3 + $0x30] sm:$0xff]
      %v1194 = vld [vmem:[%s3 + $0x38] sm:$0xff]
      %v1195 = vld [vmem:[%s3 + $0x40] sm:$0xff]
      %v1196 = vld [vmem:[%s3 + $0x48] sm:$0xff]
      %v1197 = vld [vmem:[%s3 + $0x50] sm:$0xff]
      %v1198 = vld [vmem:[%s3 + $0x58] sm:$0xff]
      %v1199 = vld [vmem:[%s3 + $0x60] sm:$0xff]
      %v1200 = vld [vmem:[%s3 + $0x68] sm:$0xff]
      %v1201 = vld [vmem:[%s3 + $0x70] sm:$0xff]
      %v1202 = vld [vmem:[%s3 + $0x78] sm:$0xff]
      %v1203 = vld [vmem:[%s3 + $0x80] sm:$0xff]
      %v1204 = vld [vmem:[%s3 + $0x88] sm:$0xff]
      %v1205 = vld [vmem:[%s3 + $0x90] sm:$0xff]
      %v1206 = vld [vmem:[%s3 + $0x98] sm:$0xff]
      %v1207 = vld [vmem:[%s3 + $0xa0] sm:$0xff]
      %v1208 = vld [vmem:[%s3 + $0xa8] sm:$0xff]
      %v1209 = vld [vmem:[%s3 + $0xb0] sm:$0xff]
      %v1210 = vld [vmem:[%s3 + $0xb8] sm:$0xff]
      %v1211 = vld [vmem:[%s3 + $0xc0] sm:$0xff]
      %v1212 = vld [vmem:[%s3 + $0xc8] sm:$0xff]
      %v1213 = vld [vmem:[%s3 + $0xd0] sm:$0xff]
      %v1214 = vld [vmem:[%s3 + $0xd8] sm:$0xff]
      %v1215 = vld [vmem:[%s3 + $0xe0] sm:$0xff]
      %v1216 = vld [vmem:[%s3 + $0xe8] sm:$0xff]
      %v1217 = vld [vmem:[%s3 + $0xf0] sm:$0xff]
      %v1218 = vld [vmem:[%s3 + $0xf8] sm:$0xff]
      %v1219 = vunpack.c.h.b16 %v1163
      %v1220 = vunpack.c.h.b16 %v1164
      %v1221 = vunpack.c.h.b16 %v1165
      %v1222 = vunpack.c.h.b16 %v1166
      %v1223 = vunpack.c.h.b16 %v1167
      %v1224 = vunpack.c.h.b16 %v1168
      %v1225 = vunpack.c.h.b16 %v1169
      %v1226 = vunpack.c.h.b16 %v1170
      %v1227 = vpack.c.b16 %v1180, %v1179
      %v1228 = vpack.c.b16 %v1220, %v1219
      %v1229 = vpack.c.b16 %v1182, %v1181
      %v1230 = vpack.c.b16 %v1222, %v1221
      %v1231 = vpack.c.b16 %v1184, %v1183
      %v1232 = vpack.c.b16 %v1224, %v1223
      %v1233 = vpack.c.b16 %v1186, %v1185
      %v1234 = vpack.c.b16 %v1226, %v1225
      %vm1235 = vsmask.f32 3328
      %vm1236 = vsmask.f32 7440
      %vm1237 = vmor %vm1235, %vm1236
      %v1239 = vshrl.u32 %v1227, 16
      %v1241 = vrot.slane %v1239, 4
      %v1242 = vshll.u32 %v1227, 16
      %v1244 = vrot.slane %v1242, 5
      %v1245 = vor.u32 %v1241, %v1244
      %v1246 = vrot.slane %v1245, 4
      %v1248 = vshll.u32 %v1228, 16
      %v1250 = vrot.slane %v1248, 5
      %v1251 = vsel %vm1237, %v1246, %v1250
      %v1253 = vshrl.u32 %v1229, 16
      %v1255 = vrot.slane %v1253, 4
      %v1256 = vshll.u32 %v1229, 16
      %v1258 = vrot.slane %v1256, 5
      %v1259 = vor.u32 %v1255, %v1258
      %v1260 = vrot.slane %v1259, 4
      %v1262 = vshll.u32 %v1230, 16
      %v1264 = vrot.slane %v1262, 5
      %v1265 = vsel %vm1237, %v1260, %v1264
      %v1267 = vshrl.u32 %v1231, 16
      %v1269 = vrot.slane %v1267, 4
      %v1270 = vshll.u32 %v1231, 16
      %v1272 = vrot.slane %v1270, 5
      %v1273 = vor.u32 %v1269, %v1272
      %v1274 = vrot.slane %v1273, 4
      %v1276 = vshll.u32 %v1232, 16
      %v1278 = vrot.slane %v1276, 5
      %v1279 = vsel %vm1237, %v1274, %v1278
      %v1281 = vshrl.u32 %v1233, 16
      %v1283 = vrot.slane %v1281, 4
      %v1284 = vshll.u32 %v1233, 16
      %v1286 = vrot.slane %v1284, 5
      %v1287 = vor.u32 %v1283, %v1286
      %v1288 = vrot.slane %v1287, 4
      %v1290 = vshll.u32 %v1234, 16
      %v1292 = vrot.slane %v1290, 5
      %v1293 = vsel %vm1237, %v1288, %v1292
      %s1294 = scalar_lea.vmem %s3, 256
      %v1295 = vld [vmem:[%s1294] sm:$0xff]
      %v1296 = vld [vmem:[%s1294 + $0x8] sm:$0xff]
      %v1297 = vld [vmem:[%s1294 + $0x10] sm:$0xff]
      %v1298 = vld [vmem:[%s1294 + $0x18] sm:$0xff]
      %v1299 = vld [vmem:[%s1294 + $0x20] sm:$0xff]
      %v1300 = vld [vmem:[%s1294 + $0x28] sm:$0xff]
      %v1301 = vld [vmem:[%s1294 + $0x30] sm:$0xff]
      %v1302 = vld [vmem:[%s1294 + $0x38] sm:$0xff]
      %v1303 = vld [vmem:[%s1294 + $0x40] sm:$0xff]
      %v1304 = vld [vmem:[%s1294 + $0x48] sm:$0xff]
      %v1305 = vld [vmem:[%s1294 + $0x50] sm:$0xff]
      %v1306 = vld [vmem:[%s1294 + $0x58] sm:$0xff]
      %v1307 = vld [vmem:[%s1294 + $0x60] sm:$0xff]
      %v1308 = vld [vmem:[%s1294 + $0x68] sm:$0xff]
      %v1309 = vld [vmem:[%s1294 + $0x70] sm:$0xff]
      %v1310 = vld [vmem:[%s1294 + $0x78] sm:$0xff]
      %v1311 = vld [vmem:[%s1294 + $0x80] sm:$0xff]
      %v1312 = vld [vmem:[%s1294 + $0x88] sm:$0xff]
      %v1313 = vld [vmem:[%s1294 + $0x90] sm:$0xff]
      %v1314 = vld [vmem:[%s1294 + $0x98] sm:$0xff]
      %v1315 = vld [vmem:[%s1294 + $0xa0] sm:$0xff]
      %v1316 = vld [vmem:[%s1294 + $0xa8] sm:$0xff]
      %v1317 = vld [vmem:[%s1294 + $0xb0] sm:$0xff]
      %v1318 = vld [vmem:[%s1294 + $0xb8] sm:$0xff]
      %v1319 = vld [vmem:[%s1294 + $0xc0] sm:$0xff]
      %v1320 = vld [vmem:[%s1294 + $0xc8] sm:$0xff]
      %v1321 = vld [vmem:[%s1294 + $0xd0] sm:$0xff]
      %v1322 = vld [vmem:[%s1294 + $0xd8] sm:$0xff]
      %v1323 = vld [vmem:[%s1294 + $0xe0] sm:$0xff]
      %v1324 = vld [vmem:[%s1294 + $0xe8] sm:$0xff]
      %v1325 = vld [vmem:[%s1294 + $0xf0] sm:$0xff]
      %v1326 = vld [vmem:[%s1294 + $0xf8] sm:$0xff]
      %v1327 = vunpack.c.l.b16 %v1251
      %v1328 = vunpack.c.h.b16 %v1251
      %v1329 = vunpack.c.l.b16 %v1265
      %v1330 = vunpack.c.h.b16 %v1265
      %v1331 = vunpack.c.l.b16 %v1279
      %v1332 = vunpack.c.h.b16 %v1279
      %v1333 = vunpack.c.l.b16 %v1293
      %v1334 = vunpack.c.h.b16 %v1293
      %v1335 = vpack.c.b16 %v1329, %v1327
      %v1336 = vpack.c.b16 %v1330, %v1328
      %v1337 = vpack.c.b16 %v1333, %v1331
      %v1338 = vpack.c.b16 %v1334, %v1332
      %v1375 = vunpack.c.l.b16 %v1295
      %v1376 = vunpack.c.h.b16 %v1295
      %v1377 = vunpack.c.l.b16 %v1296
      %v1378 = vunpack.c.h.b16 %v1296
      %v1379 = vunpack.c.l.b16 %v1297
      %v1380 = vunpack.c.h.b16 %v1297
      %v1381 = vunpack.c.l.b16 %v1298
      %v1382 = vunpack.c.h.b16 %v1298
      %v1383 = vunpack.c.l.b16 %v1299
      %v1384 = vunpack.c.h.b16 %v1299
      %v1385 = vunpack.c.l.b16 %v1300
      %v1386 = vunpack.c.h.b16 %v1300
      %v1387 = vunpack.c.l.b16 %v1301
      %v1388 = vunpack.c.h.b16 %v1301
      %v1389 = vunpack.c.l.b16 %v1302
      %v1390 = vunpack.c.h.b16 %v1302
      %v1391 = vunpack.c.l.b16 %v1303
      %v1392 = vunpack.c.h.b16 %v1303
      %v1393 = vunpack.c.l.b16 %v1304
      %v1394 = vunpack.c.h.b16 %v1304
      %v1395 = vunpack.c.l.b16 %v1305
      %v1396 = vunpack.c.h.b16 %v1305
      %v1397 = vunpack.c.l.b16 %v1306
      %v1398 = vunpack.c.h.b16 %v1306
      %v1399 = vunpack.c.l.b16 %v1307
      %v1400 = vunpack.c.h.b16 %v1307
      %v1401 = vunpack.c.l.b16 %v1308
      %v1402 = vunpack.c.h.b16 %v1308
      %v1403 = vunpack.c.l.b16 %v1309
      %v1404 = vunpack.c.h.b16 %v1309
      %v1405 = vunpack.c.l.b16 %v1310
      %v1406 = vunpack.c.h.b16 %v1310
      %v1407 = vunpack.c.l.b16 %v1311
      %v1408 = vunpack.c.h.b16 %v1311
      %v1409 = vunpack.c.l.b16 %v1312
      %v1410 = vunpack.c.h.b16 %v1312
      %v1411 = vunpack.c.l.b16 %v1313
      %v1412 = vunpack.c.h.b16 %v1313
      %v1413 = vunpack.c.l.b16 %v1314
      %v1414 = vunpack.c.h.b16 %v1314
      %v1415 = vunpack.c.l.b16 %v1315
      %v1416 = vunpack.c.h.b16 %v1315
      %v1417 = vunpack.c.l.b16 %v1316
      %v1418 = vunpack.c.h.b16 %v1316
      %v1419 = vunpack.c.l.b16 %v1317
      %v1420 = vunpack.c.h.b16 %v1317
      %v1421 = vunpack.c.l.b16 %v1318
      %v1422 = vunpack.c.h.b16 %v1318
      %v1423 = vunpack.c.l.b16 %v1319
      %v1424 = vunpack.c.h.b16 %v1319
      %v1425 = vunpack.c.l.b16 %v1320
      %v1426 = vunpack.c.h.b16 %v1320
      %v1427 = vunpack.c.l.b16 %v1321
      %v1428 = vunpack.c.h.b16 %v1321
      %v1429 = vunpack.c.l.b16 %v1322
      %v1430 = vunpack.c.h.b16 %v1322
      %v1431 = vunpack.c.l.b16 %v1323
      %v1432 = vunpack.c.h.b16 %v1323
      %v1433 = vunpack.c.l.b16 %v1324
      %v1434 = vunpack.c.h.b16 %v1324
      %v1435 = vunpack.c.l.b16 %v1325
      %v1436 = vunpack.c.h.b16 %v1325
      %v1437 = vunpack.c.l.b16 %v1326
      %v1438 = vunpack.c.h.b16 %v1326
      %v1439 = vpack.c.b16 %v1377, %v1375
      %v1440 = vpack.c.b16 %v1378, %v1376
      %v1441 = vpack.c.b16 %v1381, %v1379
      %v1442 = vpack.c.b16 %v1382, %v1380
      %v1443 = vpack.c.b16 %v1385, %v1383
      %v1444 = vpack.c.b16 %v1386, %v1384
      %v1445 = vpack.c.b16 %v1389, %v1387
      %v1446 = vpack.c.b16 %v1390, %v1388
      %v1447 = vpack.c.b16 %v1393, %v1391
      %v1448 = vpack.c.b16 %v1394, %v1392
      %v1449 = vpack.c.b16 %v1397, %v1395
      %v1450 = vpack.c.b16 %v1398, %v1396
      %v1451 = vpack.c.b16 %v1401, %v1399
      %v1452 = vpack.c.b16 %v1402, %v1400
      %v1453 = vpack.c.b16 %v1405, %v1403
      %v1454 = vpack.c.b16 %v1406, %v1404
      %v1455 = vpack.c.b16 %v1409, %v1407
      %v1456 = vpack.c.b16 %v1410, %v1408
      %v1457 = vpack.c.b16 %v1413, %v1411
      %v1458 = vpack.c.b16 %v1414, %v1412
      %v1459 = vpack.c.b16 %v1417, %v1415
      %v1460 = vpack.c.b16 %v1418, %v1416
      %v1461 = vpack.c.b16 %v1421, %v1419
      %v1462 = vpack.c.b16 %v1422, %v1420
      %v1463 = vpack.c.b16 %v1425, %v1423
      %v1464 = vpack.c.b16 %v1426, %v1424
      %v1465 = vpack.c.b16 %v1429, %v1427
      %v1466 = vpack.c.b16 %v1430, %v1428
      %v1467 = vpack.c.b16 %v1433, %v1431
      %v1468 = vpack.c.b16 %v1434, %v1432
      %v1469 = vpack.c.b16 %v1437, %v1435
      %v1470 = vpack.c.b16 %v1438, %v1436
      %1503 = vmatprep.subr.bf16.mxu0 %v1440
      %1504 = vmatpush1.bf16.msra.mxu0 %v1439
      %1505 = vmatprep.subr.bf16.mxu0 %v1442
      %1506 = vmatpush1.bf16.msra.mxu0 %v1441
      %1507 = vmatprep.subr.bf16.mxu0 %v1444
      %1508 = vmatpush1.bf16.msra.mxu0 %v1443
      %1509 = vmatprep.subr.bf16.mxu0 %v1446
      %1510 = vmatpush1.bf16.msra.mxu0 %v1445
      %1511 = vmatprep.subr.bf16.mxu0 %v1448
      %1512 = vmatpush1.bf16.msra.mxu0 %v1447
      %1513 = vmatprep.subr.bf16.mxu0 %v1450
      %1514 = vmatpush1.bf16.msra.mxu0 %v1449
      %1515 = vmatprep.subr.bf16.mxu0 %v1452
      %1516 = vmatpush1.bf16.msra.mxu0 %v1451
      %1517 = vmatprep.subr.bf16.mxu0 %v1454
      %1518 = vmatpush1.bf16.msra.mxu0 %v1453
      %1519 = vmatprep.subr.bf16.mxu0 %v1456
      %1520 = vmatpush1.bf16.msra.mxu0 %v1455
      %1521 = vmatprep.subr.bf16.mxu0 %v1458
      %1522 = vmatpush1.bf16.msra.mxu0 %v1457
      %1523 = vmatprep.subr.bf16.mxu0 %v1460
      %1524 = vmatpush1.bf16.msra.mxu0 %v1459
      %1525 = vmatprep.subr.bf16.mxu0 %v1462
      %1526 = vmatpush1.bf16.msra.mxu0 %v1461
      %1527 = vmatprep.subr.bf16.mxu0 %v1464
      %1528 = vmatpush1.bf16.msra.mxu0 %v1463
      %1529 = vmatprep.subr.bf16.mxu0 %v1466
      %1530 = vmatpush1.bf16.msra.mxu0 %v1465
      %1531 = vmatprep.subr.bf16.mxu0 %v1468
      %1532 = vmatpush1.bf16.msra.mxu0 %v1467
      %1533 = vmatprep.subr.bf16.mxu0 %v1470
      %1534 = vmatpush1.bf16.msra.mxu0 %v1469
      %1535 = vmatprep.mubr.bf16.mxu0 %v1336
      %1536 = vmatmul.mubr.bf16.gmra.mrb[0].mxu0 %v1335
      %v1537 = vpop.f32.mrb[0].mxu0
      %v1538 = vadd.f32 0.0, %v1537
      %v1539 = vpop.f32.mrb[0].mxu0
      %v1540 = vadd.f32 0.0, %v1539
      %v1541 = vpop.f32.mrb[0].mxu0
      %v1542 = vadd.f32 0.0, %v1541
      %v1543 = vpop.f32.mrb[0].mxu0
      %v1544 = vadd.f32 0.0, %v1543
      %1545 = vmatprep.mubr.bf16.mxu0 %v1338
      %1546 = vmatmul.mubr.bf16.gmra.mrb[0].mxu0 %v1337
      %v1547 = vpop.f32.mrb[0].mxu0
      %v1548 = vadd.f32 0.0, %v1547
      %v1549 = vpop.f32.mrb[0].mxu0
      %v1550 = vadd.f32 0.0, %v1549
      %v1551 = vpop.f32.mrb[0].mxu0
      %v1552 = vadd.f32 0.0, %v1551
      %v1553 = vpop.f32.mrb[0].mxu0
      %v1554 = vadd.f32 0.0, %v1553
      %1555 = vdwg.mxu0
      %v1556 = vpack.c.b16 %v1181, %v1179
      %v1557 = vpack.c.b16 %v1182, %v1180
      %v1558 = vpack.c.b16 %v1185, %v1183
      %v1559 = vpack.c.b16 %v1186, %v1184
      %v1596 = vunpack.c.l.b16 %v1187
      %v1597 = vunpack.c.h.b16 %v1187
      %v1598 = vunpack.c.l.b16 %v1188
      %v1599 = vunpack.c.h.b16 %v1188
      %v1600 = vunpack.c.l.b16 %v1189
      %v1601 = vunpack.c.h.b16 %v1189
      %v1602 = vunpack.c.l.b16 %v1190
      %v1603 = vunpack.c.h.b16 %v1190
      %v1604 = vunpack.c.l.b16 %v1191
      %v1605 = vunpack.c.h.b16 %v1191
      %v1606 = vunpack.c.l.b16 %v1192
      %v1607 = vunpack.c.h.b16 %v1192
      %v1608 = vunpack.c.l.b16 %v1193
      %v1609 = vunpack.c.h.b16 %v1193
      %v1610 = vunpack.c.l.b16 %v1194
      %v1611 = vunpack.c.h.b16 %v1194
      %v1612 = vunpack.c.l.b16 %v1195
      %v1613 = vunpack.c.h.b16 %v1195
      %v1614 = vunpack.c.l.b16 %v1196
      %v1615 = vunpack.c.h.b16 %v1196
      %v1616 = vunpack.c.l.b16 %v1197
      %v1617 = vunpack.c.h.b16 %v1197
      %v1618 = vunpack.c.l.b16 %v1198
      %v1619 = vunpack.c.h.b16 %v1198
      %v1620 = vunpack.c.l.b16 %v1199
      %v1621 = vunpack.c.h.b16 %v1199
      %v1622 = vunpack.c.l.b16 %v1200
      %v1623 = vunpack.c.h.b16 %v1200
      %v1624 = vunpack.c.l.b16 %v1201
      %v1625 = vunpack.c.h.b16 %v1201
      %v1626 = vunpack.c.l.b16 %v1202
      %v1627 = vunpack.c.h.b16 %v1202
      %v1628 = vunpack.c.l.b16 %v1203
      %v1629 = vunpack.c.h.b16 %v1203
      %v1630 = vunpack.c.l.b16 %v1204
      %v1631 = vunpack.c.h.b16 %v1204
      %v1632 = vunpack.c.l.b16 %v1205
      %v1633 = vunpack.c.h.b16 %v1205
      %v1634 = vunpack.c.l.b16 %v1206
      %v1635 = vunpack.c.h.b16 %v1206
      %v1636 = vunpack.c.l.b16 %v1207
      %v1637 = vunpack.c.h.b16 %v1207
      %v1638 = vunpack.c.l.b16 %v1208
      %v1639 = vunpack.c.h.b16 %v1208
      %v1640 = vunpack.c.l.b16 %v1209
      %v1641 = vunpack.c.h.b16 %v1209
      %v1642 = vunpack.c.l.b16 %v1210
      %v1643 = vunpack.c.h.b16 %v1210
      %v1644 = vunpack.c.l.b16 %v1211
      %v1645 = vunpack.c.h.b16 %v1211
      %v1646 = vunpack.c.l.b16 %v1212
      %v1647 = vunpack.c.h.b16 %v1212
      %v1648 = vunpack.c.l.b16 %v1213
      %v1649 = vunpack.c.h.b16 %v1213
      %v1650 = vunpack.c.l.b16 %v1214
      %v1651 = vunpack.c.h.b16 %v1214
      %v1652 = vunpack.c.l.b16 %v1215
      %v1653 = vunpack.c.h.b16 %v1215
      %v1654 = vunpack.c.l.b16 %v1216
      %v1655 = vunpack.c.h.b16 %v1216
      %v1656 = vunpack.c.l.b16 %v1217
      %v1657 = vunpack.c.h.b16 %v1217
      %v1658 = vunpack.c.l.b16 %v1218
      %v1659 = vunpack.c.h.b16 %v1218
      %v1660 = vpack.c.b16 %v1598, %v1596
      %v1661 = vpack.c.b16 %v1599, %v1597
      %v1662 = vpack.c.b16 %v1602, %v1600
      %v1663 = vpack.c.b16 %v1603, %v1601
      %v1664 = vpack.c.b16 %v1606, %v1604
      %v1665 = vpack.c.b16 %v1607, %v1605
      %v1666 = vpack.c.b16 %v1610, %v1608
      %v1667 = vpack.c.b16 %v1611, %v1609
      %v1668 = vpack.c.b16 %v1614, %v1612
      %v1669 = vpack.c.b16 %v1615, %v1613
      %v1670 = vpack.c.b16 %v1618, %v1616
      %v1671 = vpack.c.b16 %v1619, %v1617
      %v1672 = vpack.c.b16 %v1622, %v1620
      %v1673 = vpack.c.b16 %v1623, %v1621
      %v1674 = vpack.c.b16 %v1626, %v1624
      %v1675 = vpack.c.b16 %v1627, %v1625
      %v1676 = vpack.c.b16 %v1630, %v1628
      %v1677 = vpack.c.b16 %v1631, %v1629
      %v1678 = vpack.c.b16 %v1634, %v1632
      %v1679 = vpack.c.b16 %v1635, %v1633
      %v1680 = vpack.c.b16 %v1638, %v1636
      %v1681 = vpack.c.b16 %v1639, %v1637
      %v1682 = vpack.c.b16 %v1642, %v1640
      %v1683 = vpack.c.b16 %v1643, %v1641
      %v1684 = vpack.c.b16 %v1646, %v1644
      %v1685 = vpack.c.b16 %v1647, %v1645
      %v1686 = vpack.c.b16 %v1650, %v1648
      %v1687 = vpack.c.b16 %v1651, %v1649
      %v1688 = vpack.c.b16 %v1654, %v1652
      %v1689 = vpack.c.b16 %v1655, %v1653
      %v1690 = vpack.c.b16 %v1658, %v1656
      %v1691 = vpack.c.b16 %v1659, %v1657
      %1724 = vmatprep.subr.bf16.mxu0 %v1661
      %1725 = vmatpush1.bf16.msra.mxu0 %v1660
      %1726 = vmatprep.subr.bf16.mxu0 %v1663
      %1727 = vmatpush1.bf16.msra.mxu0 %v1662
      %1728 = vmatprep.subr.bf16.mxu0 %v1665
      %1729 = vmatpush1.bf16.msra.mxu0 %v1664
      %1730 = vmatprep.subr.bf16.mxu0 %v1667
      %1731 = vmatpush1.bf16.msra.mxu0 %v1666
      %1732 = vmatprep.subr.bf16.mxu0 %v1669
      %1733 = vmatpush1.bf16.msra.mxu0 %v1668
      %1734 = vmatprep.subr.bf16.mxu0 %v1671
      %1735 = vmatpush1.bf16.msra.mxu0 %v1670
      %1736 = vmatprep.subr.bf16.mxu0 %v1673
      %1737 = vmatpush1.bf16.msra.mxu0 %v1672
      %1738 = vmatprep.subr.bf16.mxu0 %v1675
      %1739 = vmatpush1.bf16.msra.mxu0 %v1674
      %1740 = vmatprep.subr.bf16.mxu0 %v1677
      %1741 = vmatpush1.bf16.msra.mxu0 %v1676
      %1742 = vmatprep.subr.bf16.mxu0 %v1679
      %1743 = vmatpush1.bf16.msra.mxu0 %v1678
      %1744 = vmatprep.subr.bf16.mxu0 %v1681
      %1745 = vmatpush1.bf16.msra.mxu0 %v1680
      %1746 = vmatprep.subr.bf16.mxu0 %v1683
      %1747 = vmatpush1.bf16.msra.mxu0 %v1682
      %1748 = vmatprep.subr.bf16.mxu0 %v1685
      %1749 = vmatpush1.bf16.msra.mxu0 %v1684
      %1750 = vmatprep.subr.bf16.mxu0 %v1687
      %1751 = vmatpush1.bf16.msra.mxu0 %v1686
      %1752 = vmatprep.subr.bf16.mxu0 %v1689
      %1753 = vmatpush1.bf16.msra.mxu0 %v1688
      %1754 = vmatprep.subr.bf16.mxu0 %v1691
      %1755 = vmatpush1.bf16.msra.mxu0 %v1690
      %1756 = vmatprep.mubr.bf16.mxu0 %v1557
      %1757 = vmatmul.mubr.bf16.gmra.mrb[0].mxu0 %v1556
      %v1758 = vpop.f32.mrb[0].mxu0
      %v1759 = vadd.f32 %v1538, %v1758
      %v1760 = vpop.f32.mrb[0].mxu0
      %v1761 = vadd.f32 %v1540, %v1760
      %v1762 = vpop.f32.mrb[0].mxu0
      %v1763 = vadd.f32 %v1542, %v1762
      %v1764 = vpop.f32.mrb[0].mxu0
      %v1765 = vadd.f32 %v1544, %v1764
      %1766 = vmatprep.mubr.bf16.mxu0 %v1559
      %1767 = vmatmul.mubr.bf16.gmra.mrb[0].mxu0 %v1558
      %v1768 = vpop.f32.mrb[0].mxu0
      %v1769 = vadd.f32 %v1548, %v1768
      %v1770 = vpop.f32.mrb[0].mxu0
      %v1771 = vadd.f32 %v1550, %v1770
      %v1772 = vpop.f32.mrb[0].mxu0
      %v1773 = vadd.f32 %v1552, %v1772
      %v1774 = vpop.f32.mrb[0].mxu0
      %v1775 = vadd.f32 %v1554, %v1774
      %1776 = vdwg.mxu0
      %v1777 = vrot.slane %v1227, 5
      %v1778 = vrot.slane %v1777, 4
      %v1779 = vrot.slane %v1228, 5
      %v1780 = vsel %vm269, %v1778, %v1779
      %v1781 = vrot.slane %v1229, 5
      %v1782 = vrot.slane %v1781, 4
      %v1783 = vrot.slane %v1230, 5
      %v1784 = vsel %vm269, %v1782, %v1783
      %v1785 = vrot.slane %v1231, 5
      %v1786 = vrot.slane %v1785, 4
      %v1787 = vrot.slane %v1232, 5
      %v1788 = vsel %vm269, %v1786, %v1787
      %v1789 = vrot.slane %v1233, 5
      %v1790 = vrot.slane %v1789, 4
      %v1791 = vrot.slane %v1234, 5
      %v1792 = vsel %vm269, %v1790, %v1791
      %s1793 = scalar_lea.vmem %s3, 512
      %v1794 = vld [vmem:[%s1793] sm:$0xff]
      %v1795 = vld [vmem:[%s1793 + $0x8] sm:$0xff]
      %v1796 = vld [vmem:[%s1793 + $0x10] sm:$0xff]
      %v1797 = vld [vmem:[%s1793 + $0x18] sm:$0xff]
      %v1798 = vld [vmem:[%s1793 + $0x20] sm:$0xff]
      %v1799 = vld [vmem:[%s1793 + $0x28] sm:$0xff]
      %v1800 = vld [vmem:[%s1793 + $0x30] sm:$0xff]
      %v1801 = vld [vmem:[%s1793 + $0x38] sm:$0xff]
      %v1802 = vld [vmem:[%s1793 + $0x40] sm:$0xff]
      %v1803 = vld [vmem:[%s1793 + $0x48] sm:$0xff]
      %v1804 = vld [vmem:[%s1793 + $0x50] sm:$0xff]
      %v1805 = vld [vmem:[%s1793 + $0x58] sm:$0xff]
      %v1806 = vld [vmem:[%s1793 + $0x60] sm:$0xff]
      %v1807 = vld [vmem:[%s1793 + $0x68] sm:$0xff]
      %v1808 = vld [vmem:[%s1793 + $0x70] sm:$0xff]
      %v1809 = vld [vmem:[%s1793 + $0x78] sm:$0xff]
      %v1810 = vld [vmem:[%s1793 + $0x80] sm:$0xff]
      %v1811 = vld [vmem:[%s1793 + $0x88] sm:$0xff]
      %v1812 = vld [vmem:[%s1793 + $0x90] sm:$0xff]
      %v1813 = vld [vmem:[%s1793 + $0x98] sm:$0xff]
      %v1814 = vld [vmem:[%s1793 + $0xa0] sm:$0xff]
      %v1815 = vld [vmem:[%s1793 + $0xa8] sm:$0xff]
      %v1816 = vld [vmem:[%s1793 + $0xb0] sm:$0xff]
      %v1817 = vld [vmem:[%s1793 + $0xb8] sm:$0xff]
      %v1818 = vld [vmem:[%s1793 + $0xc0] sm:$0xff]
      %v1819 = vld [vmem:[%s1793 + $0xc8] sm:$0xff]
      %v1820 = vld [vmem:[%s1793 + $0xd0] sm:$0xff]
      %v1821 = vld [vmem:[%s1793 + $0xd8] sm:$0xff]
      %v1822 = vld [vmem:[%s1793 + $0xe0] sm:$0xff]
      %v1823 = vld [vmem:[%s1793 + $0xe8] sm:$0xff]
      %v1824 = vld [vmem:[%s1793 + $0xf0] sm:$0xff]
      %v1825 = vld [vmem:[%s1793 + $0xf8] sm:$0xff]
      %v1826 = vunpack.c.l.b16 %v1780
      %v1827 = vunpack.c.h.b16 %v1780
      %v1828 = vunpack.c.l.b16 %v1784
      %v1829 = vunpack.c.h.b16 %v1784
      %v1830 = vunpack.c.l.b16 %v1788
      %v1831 = vunpack.c.h.b16 %v1788
      %v1832 = vunpack.c.l.b16 %v1792
      %v1833 = vunpack.c.h.b16 %v1792
      %v1834 = vpack.c.b16 %v1828, %v1826
      %v1835 = vpack.c.b16 %v1829, %v1827
      %v1836 = vpack.c.b16 %v1832, %v1830
      %v1837 = vpack.c.b16 %v1833, %v1831
      %v1874 = vunpack.c.l.b16 %v1794
      %v1875 = vunpack.c.h.b16 %v1794
      %v1876 = vunpack.c.l.b16 %v1795
      %v1877 = vunpack.c.h.b16 %v1795
      %v1878 = vunpack.c.l.b16 %v1796
      %v1879 = vunpack.c.h.b16 %v1796
      %v1880 = vunpack.c.l.b16 %v1797
      %v1881 = vunpack.c.h.b16 %v1797
      %v1882 = vunpack.c.l.b16 %v1798
      %v1883 = vunpack.c.h.b16 %v1798
      %v1884 = vunpack.c.l.b16 %v1799
      %v1885 = vunpack.c.h.b16 %v1799
      %v1886 = vunpack.c.l.b16 %v1800
      %v1887 = vunpack.c.h.b16 %v1800
      %v1888 = vunpack.c.l.b16 %v1801
      %v1889 = vunpack.c.h.b16 %v1801
      %v1890 = vunpack.c.l.b16 %v1802
      %v1891 = vunpack.c.h.b16 %v1802
      %v1892 = vunpack.c.l.b16 %v1803
      %v1893 = vunpack.c.h.b16 %v1803
      %v1894 = vunpack.c.l.b16 %v1804
      %v1895 = vunpack.c.h.b16 %v1804
      %v1896 = vunpack.c.l.b16 %v1805
      %v1897 = vunpack.c.h.b16 %v1805
      %v1898 = vunpack.c.l.b16 %v1806
      %v1899 = vunpack.c.h.b16 %v1806
      %v1900 = vunpack.c.l.b16 %v1807
      %v1901 = vunpack.c.h.b16 %v1807
      %v1902 = vunpack.c.l.b16 %v1808
      %v1903 = vunpack.c.h.b16 %v1808
      %v1904 = vunpack.c.l.b16 %v1809
      %v1905 = vunpack.c.h.b16 %v1809
      %v1906 = vunpack.c.l.b16 %v1810
      %v1907 = vunpack.c.h.b16 %v1810
      %v1908 = vunpack.c.l.b16 %v1811
      %v1909 = vunpack.c.h.b16 %v1811
      %v1910 = vunpack.c.l.b16 %v1812
      %v1911 = vunpack.c.h.b16 %v1812
      %v1912 = vunpack.c.l.b16 %v1813
      %v1913 = vunpack.c.h.b16 %v1813
      %v1914 = vunpack.c.l.b16 %v1814
      %v1915 = vunpack.c.h.b16 %v1814
      %v1916 = vunpack.c.l.b16 %v1815
      %v1917 = vunpack.c.h.b16 %v1815
      %v1918 = vunpack.c.l.b16 %v1816
      %v1919 = vunpack.c.h.b16 %v1816
      %v1920 = vunpack.c.l.b16 %v1817
      %v1921 = vunpack.c.h.b16 %v1817
      %v1922 = vunpack.c.l.b16 %v1818
      %v1923 = vunpack.c.h.b16 %v1818
      %v1924 = vunpack.c.l.b16 %v1819
      %v1925 = vunpack.c.h.b16 %v1819
      %v1926 = vunpack.c.l.b16 %v1820
      %v1927 = vunpack.c.h.b16 %v1820
      %v1928 = vunpack.c.l.b16 %v1821
      %v1929 = vunpack.c.h.b16 %v1821
      %v1930 = vunpack.c.l.b16 %v1822
      %v1931 = vunpack.c.h.b16 %v1822
      %v1932 = vunpack.c.l.b16 %v1823
      %v1933 = vunpack.c.h.b16 %v1823
      %v1934 = vunpack.c.l.b16 %v1824
      %v1935 = vunpack.c.h.b16 %v1824
      %v1936 = vunpack.c.l.b16 %v1825
      %v1937 = vunpack.c.h.b16 %v1825
      %v1938 = vpack.c.b16 %v1876, %v1874
      %v1939 = vpack.c.b16 %v1877, %v1875
      %v1940 = vpack.c.b16 %v1880, %v1878
      %v1941 = vpack.c.b16 %v1881, %v1879
      %v1942 = vpack.c.b16 %v1884, %v1882
      %v1943 = vpack.c.b16 %v1885, %v1883
      %v1944 = vpack.c.b16 %v1888, %v1886
      %v1945 = vpack.c.b16 %v1889, %v1887
      %v1946 = vpack.c.b16 %v1892, %v1890
      %v1947 = vpack.c.b16 %v1893, %v1891
      %v1948 = vpack.c.b16 %v1896, %v1894
      %v1949 = vpack.c.b16 %v1897, %v1895
      %v1950 = vpack.c.b16 %v1900, %v1898
      %v1951 = vpack.c.b16 %v1901, %v1899
      %v1952 = vpack.c.b16 %v1904, %v1902
      %v1953 = vpack.c.b16 %v1905, %v1903
      %v1954 = vpack.c.b16 %v1908, %v1906
      %v1955 = vpack.c.b16 %v1909, %v1907
      %v1956 = vpack.c.b16 %v1912, %v1910
      %v1957 = vpack.c.b16 %v1913, %v1911
      %v1958 = vpack.c.b16 %v1916, %v1914
      %v1959 = vpack.c.b16 %v1917, %v1915
      %v1960 = vpack.c.b16 %v1920, %v1918
      %v1961 = vpack.c.b16 %v1921, %v1919
      %v1962 = vpack.c.b16 %v1924, %v1922
      %v1963 = vpack.c.b16 %v1925, %v1923
      %v1964 = vpack.c.b16 %v1928, %v1926
      %v1965 = vpack.c.b16 %v1929, %v1927
      %v1966 = vpack.c.b16 %v1932, %v1930
      %v1967 = vpack.c.b16 %v1933, %v1931
      %v1968 = vpack.c.b16 %v1936, %v1934
      %v1969 = vpack.c.b16 %v1937, %v1935
      %2002 = vmatprep.subr.bf16.mxu0 %v1939
      %2003 = vmatpush1.bf16.msra.mxu0 %v1938
      %2004 = vmatprep.subr.bf16.mxu0 %v1941
      %2005 = vmatpush1.bf16.msra.mxu0 %v1940
      %2006 = vmatprep.subr.bf16.mxu0 %v1943
      %2007 = vmatpush1.bf16.msra.mxu0 %v1942
      %2008 = vmatprep.subr.bf16.mxu0 %v1945
      %2009 = vmatpush1.bf16.msra.mxu0 %v1944
      %2010 = vmatprep.subr.bf16.mxu0 %v1947
      %2011 = vmatpush1.bf16.msra.mxu0 %v1946
      %2012 = vmatprep.subr.bf16.mxu0 %v1949
      %2013 = vmatpush1.bf16.msra.mxu0 %v1948
      %2014 = vmatprep.subr.bf16.mxu0 %v1951
      %2015 = vmatpush1.bf16.msra.mxu0 %v1950
      %2016 = vmatprep.subr.bf16.mxu0 %v1953
      %2017 = vmatpush1.bf16.msra.mxu0 %v1952
      %2018 = vmatprep.subr.bf16.mxu0 %v1955
      %2019 = vmatpush1.bf16.msra.mxu0 %v1954
      %2020 = vmatprep.subr.bf16.mxu0 %v1957
      %2021 = vmatpush1.bf16.msra.mxu0 %v1956
      %2022 = vmatprep.subr.bf16.mxu0 %v1959
      %2023 = vmatpush1.bf16.msra.mxu0 %v1958
      %2024 = vmatprep.subr.bf16.mxu0 %v1961
      %2025 = vmatpush1.bf16.msra.mxu0 %v1960
      %2026 = vmatprep.subr.bf16.mxu0 %v1963
      %2027 = vmatpush1.bf16.msra.mxu0 %v1962
      %2028 = vmatprep.subr.bf16.mxu0 %v1965
      %2029 = vmatpush1.bf16.msra.mxu0 %v1964
      %2030 = vmatprep.subr.bf16.mxu0 %v1967
      %2031 = vmatpush1.bf16.msra.mxu0 %v1966
      %2032 = vmatprep.subr.bf16.mxu0 %v1969
      %2033 = vmatpush1.bf16.msra.mxu0 %v1968
      %2034 = vmatprep.mubr.bf16.mxu0 %v1835
      %2035 = vmatmul.mubr.bf16.gmra.mrb[0].mxu0 %v1834
      %v2036 = vpop.f32.mrb[0].mxu0
      %v2037 = vadd.f32 0.0, %v2036
      %v2038 = vpop.f32.mrb[0].mxu0
      %v2039 = vadd.f32 0.0, %v2038
      %v2040 = vpop.f32.mrb[0].mxu0
      %v2041 = vadd.f32 0.0, %v2040
      %v2042 = vpop.f32.mrb[0].mxu0
      %v2043 = vadd.f32 0.0, %v2042
      %2044 = vmatprep.mubr.bf16.mxu0 %v1837
      %2045 = vmatmul.mubr.bf16.gmra.mrb[0].mxu0 %v1836
      %v2046 = vpop.f32.mrb[0].mxu0
      %v2047 = vadd.f32 0.0, %v2046
      %v2048 = vpop.f32.mrb[0].mxu0
      %v2049 = vadd.f32 0.0, %v2048
      %v2050 = vpop.f32.mrb[0].mxu0
      %v2051 = vadd.f32 0.0, %v2050
      %v2052 = vpop.f32.mrb[0].mxu0
      %v2053 = vadd.f32 0.0, %v2052
      %2054 = vdwg.mxu0
      %v2055 = vadd.f32 %v1759, %v2037
      %v2056 = vadd.f32 %v1761, %v2039
      %v2057 = vadd.f32 %v1763, %v2041
      %v2058 = vadd.f32 %v1765, %v2043
      %v2059 = vadd.f32 %v1769, %v2047
      %v2060 = vadd.f32 %v1771, %v2049
      %v2061 = vadd.f32 %v1773, %v2051
      %v2062 = vadd.f32 %v1775, %v2053
      %vm2063 = vsmask.f32 2304
      %vm2064 = vsmask.f32 6416
      %vm2065 = vmor %vm2063, %vm2064
      %v2066 = vrot.slane %v1239, 5
      %v2067 = vrot.slane %v1242, 6
      %v2068 = vor.u32 %v2066, %v2067
      %v2069 = vrot.slane %v2068, 4
      %v2070 = vshrl.u32 %v1228, 16
      %v2072 = vrot.slane %v2070, 5
      %v2073 = vrot.slane %v1248, 6
      %v2074 = vor.u32 %v2072, %v2073
      %v2075 = vsel %vm2065, %v2069, %v2074
      %v2076 = vrot.slane %v1253, 5
      %v2077 = vrot.slane %v1256, 6
      %v2078 = vor.u32 %v2076, %v2077
      %v2079 = vrot.slane %v2078, 4
      %v2080 = vshrl.u32 %v1230, 16
      %v2082 = vrot.slane %v2080, 5
      %v2083 = vrot.slane %v1262, 6
      %v2084 = vor.u32 %v2082, %v2083
      %v2085 = vsel %vm2065, %v2079, %v2084
      %v2086 = vrot.slane %v1267, 5
      %v2087 = vrot.slane %v1270, 6
      %v2088 = vor.u32 %v2086, %v2087
      %v2089 = vrot.slane %v2088, 4
      %v2090 = vshrl.u32 %v1232, 16
      %v2092 = vrot.slane %v2090, 5
      %v2093 = vrot.slane %v1276, 6
      %v2094 = vor.u32 %v2092, %v2093
      %v2095 = vsel %vm2065, %v2089, %v2094
      %v2096 = vrot.slane %v1281, 5
      %v2097 = vrot.slane %v1284, 6
      %v2098 = vor.u32 %v2096, %v2097
      %v2099 = vrot.slane %v2098, 4
      %v2100 = vshrl.u32 %v1234, 16
      %v2102 = vrot.slane %v2100, 5
      %v2103 = vrot.slane %v1290, 6
      %v2104 = vor.u32 %v2102, %v2103
      %v2105 = vsel %vm2065, %v2099, %v2104
      %s2106 = scalar_lea.vmem %s3, 768
      %v2107 = vld [vmem:[%s2106] sm:$0xff]
      %v2108 = vld [vmem:[%s2106 + $0x8] sm:$0xff]
      %v2109 = vld [vmem:[%s2106 + $0x10] sm:$0xff]
      %v2110 = vld [vmem:[%s2106 + $0x18] sm:$0xff]
      %v2111 = vld [vmem:[%s2106 + $0x20] sm:$0xff]
      %v2112 = vld [vmem:[%s2106 + $0x28] sm:$0xff]
      %v2113 = vld [vmem:[%s2106 + $0x30] sm:$0xff]
      %v2114 = vld [vmem:[%s2106 + $0x38] sm:$0xff]
      %v2115 = vld [vmem:[%s2106 + $0x40] sm:$0xff]
      %v2116 = vld [vmem:[%s2106 + $0x48] sm:$0xff]
      %v2117 = vld [vmem:[%s2106 + $0x50] sm:$0xff]
      %v2118 = vld [vmem:[%s2106 + $0x58] sm:$0xff]
      %v2119 = vld [vmem:[%s2106 + $0x60] sm:$0xff]
      %v2120 = vld [vmem:[%s2106 + $0x68] sm:$0xff]
      %v2121 = vld [vmem:[%s2106 + $0x70] sm:$0xff]
      %v2122 = vld [vmem:[%s2106 + $0x78] sm:$0xff]
      %v2123 = vld [vmem:[%s2106 + $0x80] sm:$0xff]
      %v2124 = vld [vmem:[%s2106 + $0x88] sm:$0xff]
      %v2125 = vld [vmem:[%s2106 + $0x90] sm:$0xff]
      %v2126 = vld [vmem:[%s2106 + $0x98] sm:$0xff]
      %v2127 = vld [vmem:[%s2106 + $0xa0] sm:$0xff]
      %v2128 = vld [vmem:[%s2106 + $0xa8] sm:$0xff]
      %v2129 = vld [vmem:[%s2106 + $0xb0] sm:$0xff]
      %v2130 = vld [vmem:[%s2106 + $0xb8] sm:$0xff]
      %v2131 = vld [vmem:[%s2106 + $0xc0] sm:$0xff]
      %v2132 = vld [vmem:[%s2106 + $0xc8] sm:$0xff]
      %v2133 = vld [vmem:[%s2106 + $0xd0] sm:$0xff]
      %v2134 = vld [vmem:[%s2106 + $0xd8] sm:$0xff]
      %v2135 = vld [vmem:[%s2106 + $0xe0] sm:$0xff]
      %v2136 = vld [vmem:[%s2106 + $0xe8] sm:$0xff]
      %v2137 = vld [vmem:[%s2106 + $0xf0] sm:$0xff]
      %v2138 = vld [vmem:[%s2106 + $0xf8] sm:$0xff]
      %v2139 = vunpack.c.l.b16 %v2075
      %v2140 = vunpack.c.h.b16 %v2075
      %v2141 = vunpack.c.l.b16 %v2085
      %v2142 = vunpack.c.h.b16 %v2085
      %v2143 = vunpack.c.l.b16 %v2095
      %v2144 = vunpack.c.h.b16 %v2095
      %v2145 = vunpack.c.l.b16 %v2105
      %v2146 = vunpack.c.h.b16 %v2105
      %v2147 = vpack.c.b16 %v2141, %v2139
      %v2148 = vpack.c.b16 %v2142, %v2140
      %v2149 = vpack.c.b16 %v2145, %v2143
      %v2150 = vpack.c.b16 %v2146, %v2144
      %v2187 = vunpack.c.l.b16 %v2107
      %v2188 = vunpack.c.h.b16 %v2107
      %v2189 = vunpack.c.l.b16 %v2108
      %v2190 = vunpack.c.h.b16 %v2108
      %v2191 = vunpack.c.l.b16 %v2109
      %v2192 = vunpack.c.h.b16 %v2109
      %v2193 = vunpack.c.l.b16 %v2110
      %v2194 = vunpack.c.h.b16 %v2110
      %v2195 = vunpack.c.l.b16 %v2111
      %v2196 = vunpack.c.h.b16 %v2111
      %v2197 = vunpack.c.l.b16 %v2112
      %v2198 = vunpack.c.h.b16 %v2112
      %v2199 = vunpack.c.l.b16 %v2113
      %v2200 = vunpack.c.h.b16 %v2113
      %v2201 = vunpack.c.l.b16 %v2114
      %v2202 = vunpack.c.h.b16 %v2114
      %v2203 = vunpack.c.l.b16 %v2115
      %v2204 = vunpack.c.h.b16 %v2115
      %v2205 = vunpack.c.l.b16 %v2116
      %v2206 = vunpack.c.h.b16 %v2116
      %v2207 = vunpack.c.l.b16 %v2117
      %v2208 = vunpack.c.h.b16 %v2117
      %v2209 = vunpack.c.l.b16 %v2118
      %v2210 = vunpack.c.h.b16 %v2118
      %v2211 = vunpack.c.l.b16 %v2119
      %v2212 = vunpack.c.h.b16 %v2119
      %v2213 = vunpack.c.l.b16 %v2120
      %v2214 = vunpack.c.h.b16 %v2120
      %v2215 = vunpack.c.l.b16 %v2121
      %v2216 = vunpack.c.h.b16 %v2121
      %v2217 = vunpack.c.l.b16 %v2122
      %v2218 = vunpack.c.h.b16 %v2122
      %v2219 = vunpack.c.l.b16 %v2123
      %v2220 = vunpack.c.h.b16 %v2123
      %v2221 = vunpack.c.l.b16 %v2124
      %v2222 = vunpack.c.h.b16 %v2124
      %v2223 = vunpack.c.l.b16 %v2125
      %v2224 = vunpack.c.h.b16 %v2125
      %v2225 = vunpack.c.l.b16 %v2126
      %v2226 = vunpack.c.h.b16 %v2126
      %v2227 = vunpack.c.l.b16 %v2127
      %v2228 = vunpack.c.h.b16 %v2127
      %v2229 = vunpack.c.l.b16 %v2128
      %v2230 = vunpack.c.h.b16 %v2128
      %v2231 = vunpack.c.l.b16 %v2129
      %v2232 = vunpack.c.h.b16 %v2129
      %v2233 = vunpack.c.l.b16 %v2130
      %v2234 = vunpack.c.h.b16 %v2130
      %v2235 = vunpack.c.l.b16 %v2131
      %v2236 = vunpack.c.h.b16 %v2131
      %v2237 = vunpack.c.l.b16 %v2132
      %v2238 = vunpack.c.h.b16 %v2132
      %v2239 = vunpack.c.l.b16 %v2133
      %v2240 = vunpack.c.h.b16 %v2133
      %v2241 = vunpack.c.l.b16 %v2134
      %v2242 = vunpack.c.h.b16 %v2134
      %v2243 = vunpack.c.l.b16 %v2135
      %v2244 = vunpack.c.h.b16 %v2135
      %v2245 = vunpack.c.l.b16 %v2136
      %v2246 = vunpack.c.h.b16 %v2136
      %v2247 = vunpack.c.l.b16 %v2137
      %v2248 = vunpack.c.h.b16 %v2137
      %v2249 = vunpack.c.l.b16 %v2138
      %v2250 = vunpack.c.h.b16 %v2138
      %v2251 = vpack.c.b16 %v2189, %v2187
      %v2252 = vpack.c.b16 %v2190, %v2188
      %v2253 = vpack.c.b16 %v2193, %v2191
      %v2254 = vpack.c.b16 %v2194, %v2192
      %v2255 = vpack.c.b16 %v2197, %v2195
      %v2256 = vpack.c.b16 %v2198, %v2196
      %v2257 = vpack.c.b16 %v2201, %v2199
      %v2258 = vpack.c.b16 %v2202, %v2200
      %v2259 = vpack.c.b16 %v2205, %v2203
      %v2260 = vpack.c.b16 %v2206, %v2204
      %v2261 = vpack.c.b16 %v2209, %v2207
      %v2262 = vpack.c.b16 %v2210, %v2208
      %v2263 = vpack.c.b16 %v2213, %v2211
      %v2264 = vpack.c.b16 %v2214, %v2212
      %v2265 = vpack.c.b16 %v2217, %v2215
      %v2266 = vpack.c.b16 %v2218, %v2216
      %v2267 = vpack.c.b16 %v2221, %v2219
      %v2268 = vpack.c.b16 %v2222, %v2220
      %v2269 = vpack.c.b16 %v2225, %v2223
      %v2270 = vpack.c.b16 %v2226, %v2224
      %v2271 = vpack.c.b16 %v2229, %v2227
      %v2272 = vpack.c.b16 %v2230, %v2228
      %v2273 = vpack.c.b16 %v2233, %v2231
      %v2274 = vpack.c.b16 %v2234, %v2232
      %v2275 = vpack.c.b16 %v2237, %v2235
      %v2276 = vpack.c.b16 %v2238, %v2236
      %v2277 = vpack.c.b16 %v2241, %v2239
      %v2278 = vpack.c.b16 %v2242, %v2240
      %v2279 = vpack.c.b16 %v2245, %v2243
      %v2280 = vpack.c.b16 %v2246, %v2244
      %v2281 = vpack.c.b16 %v2249, %v2247
      %v2282 = vpack.c.b16 %v2250, %v2248
      %2315 = vmatprep.subr.bf16.mxu0 %v2252
      %2316 = vmatpush1.bf16.msra.mxu0 %v2251
      %2317 = vmatprep.subr.bf16.mxu0 %v2254
      %2318 = vmatpush1.bf16.msra.mxu0 %v2253
      %2319 = vmatprep.subr.bf16.mxu0 %v2256
      %2320 = vmatpush1.bf16.msra.mxu0 %v2255
      %2321 = vmatprep.subr.bf16.mxu0 %v2258
      %2322 = vmatpush1.bf16.msra.mxu0 %v2257
      %2323 = vmatprep.subr.bf16.mxu0 %v2260
      %2324 = vmatpush1.bf16.msra.mxu0 %v2259
      %2325 = vmatprep.subr.bf16.mxu0 %v2262
      %2326 = vmatpush1.bf16.msra.mxu0 %v2261
      %2327 = vmatprep.subr.bf16.mxu0 %v2264
      %2328 = vmatpush1.bf16.msra.mxu0 %v2263
      %2329 = vmatprep.subr.bf16.mxu0 %v2266
      %2330 = vmatpush1.bf16.msra.mxu0 %v2265
      %2331 = vmatprep.subr.bf16.mxu0 %v2268
      %2332 = vmatpush1.bf16.msra.mxu0 %v2267
      %2333 = vmatprep.subr.bf16.mxu0 %v2270
      %2334 = vmatpush1.bf16.msra.mxu0 %v2269
      %2335 = vmatprep.subr.bf16.mxu0 %v2272
      %2336 = vmatpush1.bf16.msra.mxu0 %v2271
      %2337 = vmatprep.subr.bf16.mxu0 %v2274
      %2338 = vmatpush1.bf16.msra.mxu0 %v2273
      %2339 = vmatprep.subr.bf16.mxu0 %v2276
      %2340 = vmatpush1.bf16.msra.mxu0 %v2275
      %2341 = vmatprep.subr.bf16.mxu0 %v2278
      %2342 = vmatpush1.bf16.msra.mxu0 %v2277
      %2343 = vmatprep.subr.bf16.mxu0 %v2280
      %2344 = vmatpush1.bf16.msra.mxu0 %v2279
      %2345 = vmatprep.subr.bf16.mxu0 %v2282
      %2346 = vmatpush1.bf16.msra.mxu0 %v2281
      %2347 = vmatprep.mubr.bf16.mxu0 %v2148
      %2348 = vmatmul.mubr.bf16.gmra.mrb[0].mxu0 %v2147
      %v2349 = vpop.f32.mrb[0].mxu0
      %v2350 = vadd.f32 0.0, %v2349
      %v2351 = vpop.f32.mrb[0].mxu0
      %v2352 = vadd.f32 0.0, %v2351
      %v2353 = vpop.f32.mrb[0].mxu0
      %v2354 = vadd.f32 0.0, %v2353
      %v2355 = vpop.f32.mrb[0].mxu0
      %v2356 = vadd.f32 0.0, %v2355
      %2357 = vmatprep.mubr.bf16.mxu0 %v2150
      %2358 = vmatmul.mubr.bf16.gmra.mrb[0].mxu0 %v2149
      %v2359 = vpop.f32.mrb[0].mxu0
      %v2360 = vadd.f32 0.0, %v2359
      %v2361 = vpop.f32.mrb[0].mxu0
      %v2362 = vadd.f32 0.0, %v2361
      %v2363 = vpop.f32.mrb[0].mxu0
      %v2364 = vadd.f32 0.0, %v2363
      %v2365 = vpop.f32.mrb[0].mxu0
      %v2366 = vadd.f32 0.0, %v2365
      %2367 = vdwg.mxu0
      %v2368 = vadd.f32 %v2055, %v2350
      %v2369 = vadd.f32 %v2056, %v2352
      %v2370 = vadd.f32 %v2057, %v2354
      %v2371 = vadd.f32 %v2058, %v2356
      %v2372 = vadd.f32 %v2059, %v2360
      %v2373 = vadd.f32 %v2060, %v2362
      %v2374 = vadd.f32 %v2061, %v2364
      %v2375 = vadd.f32 %v2062, %v2366
      %v2376 = vrot.slane %v1227, 6
      %v2377 = vrot.slane %v2376, 4
      %v2378 = vrot.slane %v1228, 6
      %v2379 = vsel %vm655, %v2377, %v2378
      %v2380 = vrot.slane %v1229, 6
      %v2381 = vrot.slane %v2380, 4
      %v2382 = vrot.slane %v1230, 6
      %v2383 = vsel %vm655, %v2381, %v2382
      %v2384 = vrot.slane %v1231, 6
      %v2385 = vrot.slane %v2384, 4
      %v2386 = vrot.slane %v1232, 6
      %v2387 = vsel %vm655, %v2385, %v2386
      %v2388 = vrot.slane %v1233, 6
      %v2389 = vrot.slane %v2388, 4
      %v2390 = vrot.slane %v1234, 6
      %v2391 = vsel %vm655, %v2389, %v2390
      %s2392 = scalar_lea.vmem %s3, 1024
      %v2393 = vld [vmem:[%s2392] sm:$0xff]
      %v2394 = vld [vmem:[%s2392 + $0x8] sm:$0xff]
      %v2395 = vld [vmem:[%s2392 + $0x10] sm:$0xff]
      %v2396 = vld [vmem:[%s2392 + $0x18] sm:$0xff]
      %v2397 = vld [vmem:[%s2392 + $0x20] sm:$0xff]
      %v2398 = vld [vmem:[%s2392 + $0x28] sm:$0xff]
      %v2399 = vld [vmem:[%s2392 + $0x30] sm:$0xff]
      %v2400 = vld [vmem:[%s2392 + $0x38] sm:$0xff]
      %v2401 = vld [vmem:[%s2392 + $0x40] sm:$0xff]
      %v2402 = vld [vmem:[%s2392 + $0x48] sm:$0xff]
      %v2403 = vld [vmem:[%s2392 + $0x50] sm:$0xff]
      %v2404 = vld [vmem:[%s2392 + $0x58] sm:$0xff]
      %v2405 = vld [vmem:[%s2392 + $0x60] sm:$0xff]
      %v2406 = vld [vmem:[%s2392 + $0x68] sm:$0xff]
      %v2407 = vld [vmem:[%s2392 + $0x70] sm:$0xff]
      %v2408 = vld [vmem:[%s2392 + $0x78] sm:$0xff]
      %v2409 = vld [vmem:[%s2392 + $0x80] sm:$0xff]
      %v2410 = vld [vmem:[%s2392 + $0x88] sm:$0xff]
      %v2411 = vld [vmem:[%s2392 + $0x90] sm:$0xff]
      %v2412 = vld [vmem:[%s2392 + $0x98] sm:$0xff]
      %v2413 = vld [vmem:[%s2392 + $0xa0] sm:$0xff]
      %v2414 = vld [vmem:[%s2392 + $0xa8] sm:$0xff]
      %v2415 = vld [vmem:[%s2392 + $0xb0] sm:$0xff]
      %v2416 = vld [vmem:[%s2392 + $0xb8] sm:$0xff]
      %v2417 = vld [vmem:[%s2392 + $0xc0] sm:$0xff]
      %v2418 = vld [vmem:[%s2392 + $0xc8] sm:$0xff]
      %v2419 = vld [vmem:[%s2392 + $0xd0] sm:$0xff]
      %v2420 = vld [vmem:[%s2392 + $0xd8] sm:$0xff]
      %v2421 = vld [vmem:[%s2392 + $0xe0] sm:$0xff]
      %v2422 = vld [vmem:[%s2392 + $0xe8] sm:$0xff]
      %v2423 = vld [vmem:[%s2392 + $0xf0] sm:$0xff]
      %v2424 = vld [vmem:[%s2392 + $0xf8] sm:$0xff]
      %v2425 = vunpack.c.l.b16 %v2379
      %v2426 = vunpack.c.h.b16 %v2379
      %v2427 = vunpack.c.l.b16 %v2383
      %v2428 = vunpack.c.h.b16 %v2383
      %v2429 = vunpack.c.l.b16 %v2387
      %v2430 = vunpack.c.h.b16 %v2387
      %v2431 = vunpack.c.l.b16 %v2391
      %v2432 = vunpack.c.h.b16 %v2391
      %v2433 = vpack.c.b16 %v2427, %v2425
      %v2434 = vpack.c.b16 %v2428, %v2426
      %v2435 = vpack.c.b16 %v2431, %v2429
      %v2436 = vpack.c.b16 %v2432, %v2430
      %v2473 = vunpack.c.l.b16 %v2393
      %v2474 = vunpack.c.h.b16 %v2393
      %v2475 = vunpack.c.l.b16 %v2394
      %v2476 = vunpack.c.h.b16 %v2394
      %v2477 = vunpack.c.l.b16 %v2395
      %v2478 = vunpack.c.h.b16 %v2395
      %v2479 = vunpack.c.l.b16 %v2396
      %v2480 = vunpack.c.h.b16 %v2396
      %v2481 = vunpack.c.l.b16 %v2397
      %v2482 = vunpack.c.h.b16 %v2397
      %v2483 = vunpack.c.l.b16 %v2398
      %v2484 = vunpack.c.h.b16 %v2398
      %v2485 = vunpack.c.l.b16 %v2399
      %v2486 = vunpack.c.h.b16 %v2399
      %v2487 = vunpack.c.l.b16 %v2400
      %v2488 = vunpack.c.h.b16 %v2400
      %v2489 = vunpack.c.l.b16 %v2401
      %v2490 = vunpack.c.h.b16 %v2401
      %v2491 = vunpack.c.l.b16 %v2402
      %v2492 = vunpack.c.h.b16 %v2402
      %v2493 = vunpack.c.l.b16 %v2403
      %v2494 = vunpack.c.h.b16 %v2403
      %v2495 = vunpack.c.l.b16 %v2404
      %v2496 = vunpack.c.h.b16 %v2404
      %v2497 = vunpack.c.l.b16 %v2405
      %v2498 = vunpack.c.h.b16 %v2405
      %v2499 = vunpack.c.l.b16 %v2406
      %v2500 = vunpack.c.h.b16 %v2406
      %v2501 = vunpack.c.l.b16 %v2407
      %v2502 = vunpack.c.h.b16 %v2407
      %v2503 = vunpack.c.l.b16 %v2408
      %v2504 = vunpack.c.h.b16 %v2408
      %v2505 = vunpack.c.l.b16 %v2409
      %v2506 = vunpack.c.h.b16 %v2409
      %v2507 = vunpack.c.l.b16 %v2410
      %v2508 = vunpack.c.h.b16 %v2410
      %v2509 = vunpack.c.l.b16 %v2411
      %v2510 = vunpack.c.h.b16 %v2411
      %v2511 = vunpack.c.l.b16 %v2412
      %v2512 = vunpack.c.h.b16 %v2412
      %v2513 = vunpack.c.l.b16 %v2413
      %v2514 = vunpack.c.h.b16 %v2413
      %v2515 = vunpack.c.l.b16 %v2414
      %v2516 = vunpack.c.h.b16 %v2414
      %v2517 = vunpack.c.l.b16 %v2415
      %v2518 = vunpack.c.h.b16 %v2415
      %v2519 = vunpack.c.l.b16 %v2416
      %v2520 = vunpack.c.h.b16 %v2416
      %v2521 = vunpack.c.l.b16 %v2417
      %v2522 = vunpack.c.h.b16 %v2417
      %v2523 = vunpack.c.l.b16 %v2418
      %v2524 = vunpack.c.h.b16 %v2418
      %v2525 = vunpack.c.l.b16 %v2419
      %v2526 = vunpack.c.h.b16 %v2419
      %v2527 = vunpack.c.l.b16 %v2420
      %v2528 = vunpack.c.h.b16 %v2420
      %v2529 = vunpack.c.l.b16 %v2421
      %v2530 = vunpack.c.h.b16 %v2421
      %v2531 = vunpack.c.l.b16 %v2422
      %v2532 = vunpack.c.h.b16 %v2422
      %v2533 = vunpack.c.l.b16 %v2423
      %v2534 = vunpack.c.h.b16 %v2423
      %v2535 = vunpack.c.l.b16 %v2424
      %v2536 = vunpack.c.h.b16 %v2424
      %v2537 = vpack.c.b16 %v2475, %v2473
      %v2538 = vpack.c.b16 %v2476, %v2474
      %v2539 = vpack.c.b16 %v2479, %v2477
      %v2540 = vpack.c.b16 %v2480, %v2478
      %v2541 = vpack.c.b16 %v2483, %v2481
      %v2542 = vpack.c.b16 %v2484, %v2482
      %v2543 = vpack.c.b16 %v2487, %v2485
      %v2544 = vpack.c.b16 %v2488, %v2486
      %v2545 = vpack.c.b16 %v2491, %v2489
      %v2546 = vpack.c.b16 %v2492, %v2490
      %v2547 = vpack.c.b16 %v2495, %v2493
      %v2548 = vpack.c.b16 %v2496, %v2494
      %v2549 = vpack.c.b16 %v2499, %v2497
      %v2550 = vpack.c.b16 %v2500, %v2498
      %v2551 = vpack.c.b16 %v2503, %v2501
      %v2552 = vpack.c.b16 %v2504, %v2502
      %v2553 = vpack.c.b16 %v2507, %v2505
      %v2554 = vpack.c.b16 %v2508, %v2506
      %v2555 = vpack.c.b16 %v2511, %v2509
      %v2556 = vpack.c.b16 %v2512, %v2510
      %v2557 = vpack.c.b16 %v2515, %v2513
      %v2558 = vpack.c.b16 %v2516, %v2514
      %v2559 = vpack.c.b16 %v2519, %v2517
      %v2560 = vpack.c.b16 %v2520, %v2518
      %v2561 = vpack.c.b16 %v2523, %v2521
      %v2562 = vpack.c.b16 %v2524, %v2522
      %v2563 = vpack.c.b16 %v2527, %v2525
      %v2564 = vpack.c.b16 %v2528, %v2526
      %v2565 = vpack.c.b16 %v2531, %v2529
      %v2566 = vpack.c.b16 %v2532, %v2530
      %v2567 = vpack.c.b16 %v2535, %v2533
      %v2568 = vpack.c.b16 %v2536, %v2534
      %2601 = vmatprep.subr.bf16.mxu0 %v2538
      %2602 = vmatpush1.bf16.msra.mxu0 %v2537
      %2603 = vmatprep.subr.bf16.mxu0 %v2540
      %2604 = vmatpush1.bf16.msra.mxu0 %v2539
      %2605 = vmatprep.subr.bf16.mxu0 %v2542
      %2606 = vmatpush1.bf16.msra.mxu0 %v2541
      %2607 = vmatprep.subr.bf16.mxu0 %v2544
      %2608 = vmatpush1.bf16.msra.mxu0 %v2543
      %2609 = vmatprep.subr.bf16.mxu0 %v2546
      %2610 = vmatpush1.bf16.msra.mxu0 %v2545
      %2611 = vmatprep.subr.bf16.mxu0 %v2548
      %2612 = vmatpush1.bf16.msra.mxu0 %v2547
      %2613 = vmatprep.subr.bf16.mxu0 %v2550
      %2614 = vmatpush1.bf16.msra.mxu0 %v2549
      %2615 = vmatprep.subr.bf16.mxu0 %v2552
      %2616 = vmatpush1.bf16.msra.mxu0 %v2551
      %2617 = vmatprep.subr.bf16.mxu0 %v2554
      %2618 = vmatpush1.bf16.msra.mxu0 %v2553
      %2619 = vmatprep.subr.bf16.mxu0 %v2556
      %2620 = vmatpush1.bf16.msra.mxu0 %v2555
      %2621 = vmatprep.subr.bf16.mxu0 %v2558
      %2622 = vmatpush1.bf16.msra.mxu0 %v2557
      %2623 = vmatprep.subr.bf16.mxu0 %v2560
      %2624 = vmatpush1.bf16.msra.mxu0 %v2559
      %2625 = vmatprep.subr.bf16.mxu0 %v2562
      %2626 = vmatpush1.bf16.msra.mxu0 %v2561
      %2627 = vmatprep.subr.bf16.mxu0 %v2564
      %2628 = vmatpush1.bf16.msra.mxu0 %v2563
      %2629 = vmatprep.subr.bf16.mxu0 %v2566
      %2630 = vmatpush1.bf16.msra.mxu0 %v2565
      %2631 = vmatprep.subr.bf16.mxu0 %v2568
      %2632 = vmatpush1.bf16.msra.mxu0 %v2567
      %2633 = vmatprep.mubr.bf16.mxu0 %v2434
      %2634 = vmatmul.mubr.bf16.gmra.mrb[0].mxu0 %v2433
      %v2635 = vpop.f32.mrb[0].mxu0
      %v2636 = vadd.f32 0.0, %v2635
      %v2637 = vpop.f32.mrb[0].mxu0
      %v2638 = vadd.f32 0.0, %v2637
      %v2639 = vpop.f32.mrb[0].mxu0
      %v2640 = vadd.f32 0.0, %v2639
      %v2641 = vpop.f32.mrb[0].mxu0
      %v2642 = vadd.f32 0.0, %v2641
      %2643 = vmatprep.mubr.bf16.mxu0 %v2436
      %2644 = vmatmul.mubr.bf16.gmra.mrb[0].mxu0 %v2435
      %v2645 = vpop.f32.mrb[0].mxu0
      %v2646 = vadd.f32 0.0, %v2645
      %v2647 = vpop.f32.mrb[0].mxu0
      %v2648 = vadd.f32 0.0, %v2647
      %v2649 = vpop.f32.mrb[0].mxu0
      %v2650 = vadd.f32 0.0, %v2649
      %v2651 = vpop.f32.mrb[0].mxu0
      %v2652 = vadd.f32 0.0, %v2651
      %2653 = vdwg.mxu0
      %v2654 = vadd.f32 %v2368, %v2636
      %v2655 = vadd.f32 %v2369, %v2638
      %v2656 = vadd.f32 %v2370, %v2640
      %v2657 = vadd.f32 %v2371, %v2642
      %v2658 = vadd.f32 %v2372, %v2646
      %v2659 = vadd.f32 %v2373, %v2648
      %v2660 = vadd.f32 %v2374, %v2650
      %v2661 = vadd.f32 %v2375, %v2652
      %v2662 = vld [vmem:[%s4] sm:$0x3]
      %v2664 = vlaneseq
      %v2665 = vshrl.u32 %v2664, 7
      %v2666 = vsub.s32 0, %v2665
      %v2667 = vrot.slane %v2662, %v2666
      %v2668 = vlaneseq
      %v2669 = vshrl.u32 %v2668, 7
      %v2670 = vsub.s32 1, %v2669
      %v2671 = vrot.slane %v2662, %v2670
      %v2674 = vadd.f32 %v2654, %v2667
      %v2675 = vadd.f32 %v2655, %v2671
      %v2676 = vadd.f32 %v2656, %v2667
      %v2677 = vadd.f32 %v2657, %v2671
      %v2678 = vadd.f32 %v2658, %v2667
      %v2679 = vadd.f32 %v2659, %v2671
      %v2680 = vadd.f32 %v2660, %v2667
      %v2681 = vadd.f32 %v2661, %v2671
      %v2682 = vmax.f32 %v2674, 0.0
      %v2683 = vmax.f32 %v2675, 0.0
      %v2684 = vmax.f32 %v2676, 0.0
      %v2685 = vmax.f32 %v2677, 0.0
      %v2686 = vmax.f32 %v2678, 0.0
      %v2687 = vmax.f32 %v2679, 0.0
      %v2688 = vmax.f32 %v2680, 0.0
      %v2689 = vmax.f32 %v2681, 0.0
      %2694 = vrot.lane.b32.xlu0 %v2682, 96
      %v2695 = vpop.permute.xlu0 %2694
      %2696 = vrot.lane.b32.xlu0 %v2684, 96
      %v2697 = vpop.permute.xlu0 %2696
      %2698 = vrot.lane.b32.xlu0 %v2686, 96
      %v2699 = vpop.permute.xlu0 %2698
      %2700 = vrot.lane.b32.xlu0 %v2688, 96
      %v2701 = vpop.permute.xlu0 %2700
      %v2706 = vmax.f32 %v2682, %v2695
      %v2707 = vmax.f32 %v2684, %v2697
      %v2708 = vmax.f32 %v2686, %v2699
      %v2709 = vmax.f32 %v2688, %v2701
      %2710 = vrot.lane.b32.xlu0 %v2682, 64
      %v2711 = vpop.permute.xlu0 %2710
      %2712 = vrot.lane.b32.xlu0 %v2684, 64
      %v2713 = vpop.permute.xlu0 %2712
      %2714 = vrot.lane.b32.xlu0 %v2686, 64
      %v2715 = vpop.permute.xlu0 %2714
      %2716 = vrot.lane.b32.xlu0 %v2688, 64
      %v2717 = vpop.permute.xlu0 %2716
      %v2722 = vmax.f32 %v2706, %v2711
      %v2723 = vmax.f32 %v2707, %v2713
      %v2724 = vmax.f32 %v2708, %v2715
      %v2725 = vmax.f32 %v2709, %v2717
      %2726 = vrot.lane.b32.xlu0 %v2682, 32
      %v2727 = vpop.permute.xlu0 %2726
      %2728 = vrot.lane.b32.xlu0 %v2684, 32
      %v2729 = vpop.permute.xlu0 %2728
      %2730 = vrot.lane.b32.xlu0 %v2686, 32
      %v2731 = vpop.permute.xlu0 %2730
      %2732 = vrot.lane.b32.xlu0 %v2688, 32
      %v2733 = vpop.permute.xlu0 %2732
      %v2738 = vmax.f32 %v2722, %v2727
      %v2739 = vmax.f32 %v2723, %v2729
      %v2740 = vmax.f32 %v2724, %v2731
      %v2741 = vmax.f32 %v2725, %v2733
      %v2742 = vmax.f32 %v2738, %v2683
      %v2743 = vmax.f32 %v2739, %v2685
      %v2744 = vmax.f32 %v2740, %v2687
      %v2745 = vmax.f32 %v2741, %v2689
      %vm2746 = vcmask 258048
      %v2747 = vsel %vm2746, %v2742, -inf
      %v2748 = vrot.slane %v2747, 4
      %v2749 = vmax.f32 %v2747, %v2748
      %v2750 = vrot.slane %v2749, 2
      %v2751 = vmax.f32 %v2749, %v2750
      %v2752 = vrot.slane %v2751, 1
      %v2753 = vmax.f32 %v2751, %v2752
      %v2754 = vsel %vm2746, %v2743, -inf
      %v2755 = vrot.slane %v2754, 4
      %v2756 = vmax.f32 %v2754, %v2755
      %v2757 = vrot.slane %v2756, 2
      %v2758 = vmax.f32 %v2756, %v2757
      %v2759 = vrot.slane %v2758, 1
      %v2760 = vmax.f32 %v2758, %v2759
      %v2761 = vsel %vm2746, %v2744, -inf
      %v2762 = vrot.slane %v2761, 4
      %v2763 = vmax.f32 %v2761, %v2762
      %v2764 = vrot.slane %v2763, 2
      %v2765 = vmax.f32 %v2763, %v2764
      %v2766 = vrot.slane %v2765, 1
      %v2767 = vmax.f32 %v2765, %v2766
      %v2768 = vsel %vm2746, %v2745, -inf
      %v2769 = vrot.slane %v2768, 4
      %v2770 = vmax.f32 %v2768, %v2769
      %v2771 = vrot.slane %v2770, 2
      %v2772 = vmax.f32 %v2770, %v2771
      %v2773 = vrot.slane %v2772, 1
      %v2774 = vmax.f32 %v2772, %v2773
      %2776 = vrot.lane.b32.xlu0 %v2760, 32
      %v2777 = vpop.permute.xlu0 %2776
      %2780 = vrot.lane.b32.xlu0 %v2767, 64
      %v2781 = vpop.permute.xlu0 %2780
      %2784 = vrot.lane.b32.xlu0 %v2774, 96
      %v2785 = vpop.permute.xlu0 %2784
      %vm2787 = vcmask 261120
      %v2788 = vsel %vm2787, %v2753, %v2777
      %vm2789 = vcmask 523264
      %v2790 = vsel %vm2789, %v2788, %v2781
      %vm2791 = vcmask 785408
      %v2792 = vsel %vm2791, %v2790, %v2785
      %2793 = vst [vmem:[%s225] sm:$0x1] %v2792
      %p2794 = scmp.lt.s32.totalorder %s16, 1
      %s2795 = scalar_select %p2794, %s16, 1
      %s2796 = scalar_lea.vmem %s5, %s2795
      // Predicated region
      $region41: #{forward.1} parent=39 // pred_check
        %p2797 = pneg %p144
      $region42: #{forward.1} parent=39 // pred_check_branch
        %2799 = sbr.rel (%p2797) target = $region44
      $region43: #{forward.1} parent=39 // pred_region
        _
      $region44: #{forward.1} parent=39 // pred_fallthru
        _
    $region40: #{forward.1} parent=5 // pred_fallthru
      _
    %p2800 = scmp.le.s32.totalorder 2, %s11
    // Predicated region
    $region45: #{forward.1} parent=5 // pred_check
      %p2801 = pneg %p2800
    $region46: #{forward.1} parent=5 // pred_check_branch
      %2803 = sbr.rel (%p2801) target = $region48
    $region47: #{forward.1} parent=5 // pred_region
      %s2804 = ssub.s32 %s11, 2
      // Predicated region
      $region49: #{forward.1} parent=47 // pred_check
        %p2805 = pneg %p150
      $region50: #{forward.1} parent=47 // pred_check_branch
        %2807 = sbr.rel (%p2805) target = $region52
      $region51: #{forward.1} parent=47 // pred_region
        %p2808 = scmp.lt.s32.totalorder %s17, 1
        %s2809 = scalar_select %p2808, %s17, 1
        %s2810 = scalar_lea.vmem %s5, %s2809
      $region52: #{forward.1} parent=47 // pred_fallthru
        _
    $region48: #{forward.1} parent=5 // pred_fallthru
      _
  $region6: #{forward.1} parent=0 // loop_footer
    %s15 = sadd.s32 1, %s11
  $region7: #{forward.1} parent=0 // loop_footer_branch
    %10 = sbr.rel target = $region3
  $region8: #{forward.1} parent=0 // loop_exit
    _

</llo_original>
